<compile_context>
chip_gen: v7x
topology: tpu7x:2x2x1
jax: 0.10.0
libtpu: 0.0.40
codegen_flags: <defaults>
</compile_context>

<pallas_src>
import jax
import jax.numpy as jnp
from jax import lax
from jax.experimental import pallas as pl
from jax.experimental.pallas import tpu as pltpu

# ---- hyperparameters from the PyTorch module --------------------------------
VOCAB = 21
EMBED = 768
HIDDEN = 10
PAD_IDX = 1

NGATES = 4
GP = 32            # padded per-gate lane width; 4*GP = 128 = one lane group
VOCABP = 32        # vocab padded for the one-hot matmul contraction
B_BLK = 8          # batch rows per block (one f32 sublane tile)


def _round_up(x, m):
    return (x + m - 1) // m * m


# ---- Pallas kernel: time-tiled LSTM recurrence --------------------------------
def lstm_kernel(tok_ref, g_ref, whh_ref, len_ref, h_out_ref, h_sc, c_sc):
    """tok_ref:   (Tc, B_BLK, 1) i32   token ids for this (batch, time) block
       g_ref:     (VOCABP, 4*GP) f32   fused emb@W_ih table, bias folded, gate-packed
       whh_ref:   (GP, 4*GP)     bf16  recurrent weights, gate-packed, zero padded
       len_ref:   (B_BLK, 1)     i32   sequence length per batch row
       h_out_ref: (B_BLK, GP)    f32   final hidden state (valid lanes [:HIDDEN])
       h_sc/c_sc: (B_BLK, GP)    f32   state carried across time blocks"""
    t_pid = pl.program_id(1)
    n_t = pl.num_programs(1)
    Tc = tok_ref.shape[0]

    @pl.when(t_pid == 0)
    def _():
        h_sc[...] = jnp.zeros_like(h_sc)
        c_sc[...] = jnp.zeros_like(c_sc)

    # Hoisted, VMEM-resident operands (constant across the time loop).
    g_tab = g_ref[...]                                          # (VOCABP, 4*GP) f32
    whh = whh_ref[...]                                          # (GP, 4*GP) bf16
    lens = jnp.broadcast_to(len_ref[...], (B_BLK, GP))          # (B_BLK, GP) i32
    lane_iota = lax.broadcasted_iota(jnp.int32, (B_BLK, VOCABP), 1)
    t_base = t_pid * Tc

    def step(t, carry):
        h, c = carry
        tok = tok_ref[t]                                        # (B_BLK, 1) i32
        onehot = (lane_iota == tok).astype(jnp.float32)         # (B_BLK, VOCABP)
        # x-gates: no dependence on h -> off the serial critical path.
        gx = jnp.dot(onehot, g_tab, preferred_element_type=jnp.float32)
        # recurrent gates: bf16 MXU matmul, f32 accumulate (the critical path).
        gh = jnp.dot(h.astype(jnp.bfloat16), whh,
                     preferred_element_type=jnp.float32)
        gates = gx + gh                                         # (B_BLK, 4*GP) f32
        # PyTorch gate order: input, forget, cell(g), output.
        i = jax.nn.sigmoid(gates[:, 0 * GP:1 * GP])
        f = jax.nn.sigmoid(gates[:, 1 * GP:2 * GP])
        g = jnp.tanh(gates[:, 2 * GP:3 * GP])
        o = jax.nn.sigmoid(gates[:, 3 * GP:4 * GP])
        c_new = f * c + i * g
        h_new = o * jnp.tanh(c_new)
        # pack_padded_sequence semantics: state advances only while t < length[b].
        # Pad lanes (>= HIDDEN) see zero weights+bias, so with c0 = 0 they stay
        # exactly 0 (and the zero rows of W_hh block any leak regardless).
        valid = lens > (t_base + t)
        return jnp.where(valid, h_new, h), jnp.where(valid, c_new, c)

    h, c = lax.fori_loop(0, Tc, step, (h_sc[...], c_sc[...]),
                         unroll=min(8, Tc))
    h_sc[...] = h
    c_sc[...] = c

    @pl.when(t_pid == n_t - 1)
    def _():
        h_out_ref[...] = h


# ---- wrapper -----------------------------------------------------------------
def myrnn_forward(text, text_lengths, params, *, t_chunk=32):
    """text: (T, B) int32 token ids; text_lengths: (B,) int32."""
    T, B = text.shape
    Bp = _round_up(max(B, B_BLK), B_BLK)
    Tc = min(t_chunk, _round_up(T, 8))
    Tp = _round_up(T, Tc)
    nb = Bp // B_BLK
    nt = Tp // Tc

    # Embedding x W_ih fusion (one-time (21,768)@(768,40) matmul), bias folded in.
    G = jnp.dot(params["embedding"], params["w_ih"],
                preferred_element_type=jnp.float32)                  # (VOCAB, 4H)
    G = G + (params["b_ih"] + params["b_hh"])[None, :]

    # Gate-packed table: gate k occupies lanes [k*GP, k*GP + HIDDEN).
    G_pack = jnp.zeros((VOCABP, NGATES, GP), jnp.float32)
    G_pack = G_pack.at[:VOCAB, :, :HIDDEN].set(G.reshape(VOCAB, NGATES, HIDDEN))
    G_pack = G_pack.reshape(VOCABP, NGATES * GP)                     # f32 (32, 128)

    W_pack = jnp.zeros((GP, NGATES, GP), jnp.float32)
    W_pack = W_pack.at[:HIDDEN, :, :HIDDEN].set(
        params["w_hh"].reshape(HIDDEN, NGATES, HIDDEN))
    W_pack = W_pack.reshape(GP, NGATES * GP).astype(jnp.bfloat16)    # bf16 (32, 128)

    # Only the raw token ids are streamed (padded rows/steps use PAD_IDX; they are
    # masked out by the length check so they never touch the state).
    tok = jnp.full((Tp, Bp, 1), PAD_IDX, jnp.int32)
    tok = tok.at[:T, :B, 0].set(text.astype(jnp.int32))

    lens = jnp.zeros((Bp, 1), jnp.int32).at[:B, 0].set(
        text_lengths.astype(jnp.int32))

    h_final = pl.pallas_call(
        lstm_kernel,
        out_shape=jax.ShapeDtypeStruct((Bp, GP), jnp.float32),
        grid_spec=pltpu.PrefetchScalarGridSpec(
            num_scalar_prefetch=0,
            grid=(nb, nt),
            in_specs=[
                pl.BlockSpec((Tc, B_BLK, 1), lambda b, t: (t, b, 0)),        # tokens
                pl.BlockSpec((VOCABP, NGATES * GP), lambda b, t: (0, 0)),    # G table
                pl.BlockSpec((GP, NGATES * GP), lambda b, t: (0, 0)),        # W_hh
                pl.BlockSpec((B_BLK, 1), lambda b, t: (b, 0)),               # lengths
            ],
            out_specs=pl.BlockSpec((B_BLK, GP), lambda b, t: (b, 0)),
            scratch_shapes=[pltpu.VMEM((B_BLK, GP), jnp.float32),            # h
                            pltpu.VMEM((B_BLK, GP), jnp.float32)],           # c
        ),
        compiler_params=pltpu.CompilerParams(
            dimension_semantics=("parallel", "arbitrary")),
    )(tok, G_pack, W_pack, lens)

    hidden = h_final[:B, :HIDDEN]                                    # (B, H)
    # Final Linear(10 -> 1) outside the kernel (trivially cheap; avoids a
    # lane-width-1 masked store inside the kernel).
    return jnp.dot(hidden, params["w_dense"]) + params["b_dense"][None, :]


# ---- pure-JAX reference (unfused, f32) for correctness ------------------------
def myrnn_reference(text, text_lengths, params):
    T, B = text.shape
    embedded = jnp.take(params["embedding"], text, axis=0)           # (T, B, E)
    b = params["b_ih"] + params["b_hh"]

    def step(carry, xs):
        h, c = carry
        x_t, t = xs
        gates = x_t @ params["w_ih"] + h @ params["w_hh"] + b
        i = jax.nn.sigmoid(gates[:, 0 * HIDDEN:1 * HIDDEN])
        f = jax.nn.sigmoid(gates[:, 1 * HIDDEN:2 * HIDDEN])
        g = jnp.tanh(gates[:, 2 * HIDDEN:3 * HIDDEN])
        o = jax.nn.sigmoid(gates[:, 3 * HIDDEN:4 * HIDDEN])
        c_new = f * c + i * g
        h_new = o * jnp.tanh(c_new)
        m = (t < text_lengths)[:, None]
        return (jnp.where(m, h_new, h), jnp.where(m, c_new, c)), None

    h0 = jnp.zeros((B, HIDDEN), jnp.float32)
    c0 = jnp.zeros((B, HIDDEN), jnp.float32)
    (h, _), _ = lax.scan(step, (h0, c0), (embedded, jnp.arange(T, dtype=jnp.int32)))
    return h @ params["w_dense"] + params["b_dense"][None, :]


# ---- deterministic parameter init (shapes from nn.Embedding/nn.LSTM/nn.Linear) -
def init_params(key):
    ks = jax.random.split(key, 7)
    k_lstm = 1.0 / jnp.sqrt(HIDDEN)
    k_lin = 1.0 / jnp.sqrt(HIDDEN)

    emb = jax.random.normal(ks[0], (VOCAB, EMBED), jnp.float32)
    emb = emb.at[PAD_IDX].set(0.0)                                   # padding_idx row

    return {
        "embedding": emb,
        # stored pre-transposed so gates are computed as x @ W
        "w_ih": jax.random.uniform(ks[1], (EMBED, 4 * HIDDEN), jnp.float32,
                                   -k_lstm, k_lstm),
        "w_hh": jax.random.uniform(ks[2], (HIDDEN, 4 * HIDDEN), jnp.float32,
                                   -k_lstm, k_lstm),
        "b_ih": jax.random.uniform(ks[3], (4 * HIDDEN,), jnp.float32,
                                   -k_lstm, k_lstm),
        "b_hh": jax.random.uniform(ks[4], (4 * HIDDEN,), jnp.float32,
                                   -k_lstm, k_lstm),
        "w_dense": jax.random.uniform(ks[5], (HIDDEN, 1), jnp.float32,
                                      -k_lin, k_lin),
        "b_dense": jax.random.uniform(ks[6], (1,), jnp.float32,
                                      -k_lin, k_lin),
    }


if __name__ == "__main__":
    key = jax.random.PRNGKey(0)
    k_p, k_t = jax.random.split(key)

    T, B = 8, 4
    params = init_params(k_p)

    # token ids in [0, VOCAB); lengths sorted descending (pack_padded enforce_sorted)
    text = jax.random.randint(k_t, (T, B), 0, VOCAB, dtype=jnp.int32)
    text_lengths = jnp.array([8, 6, 5, 3], dtype=jnp.int32)

    out = jax.block_until_ready(myrnn_forward(text, text_lengths, params))
    ref = jax.block_until_ready(myrnn_reference(text, text_lengths, params))

    assert out.shape == (B, 1) and out.dtype == jnp.float32
    assert jnp.allclose(out, ref, atol=5e-3, rtol=5e-3)
    print("KERNEL_OK")
</pallas_src>

<mosaic_0001>
module attributes {stable_mosaic.version = 11 : i64} {
  func.func @lstm_kernel(%arg0: i32, %arg1: i32, %arg2: memref<8x8x1xi32, #tpu.memory_space<vmem>>, %arg3: memref<32x128xf32, #tpu.memory_space<vmem>>, %arg4: memref<32x128xbf16, #tpu.memory_space<vmem>>, %arg5: memref<8x1xi32, #tpu.memory_space<vmem>>, %arg6: memref<8x32xf32, #tpu.memory_space<vmem>>, %arg7: memref<8x32xf32, #tpu.memory_space<vmem>>, %arg8: memref<8x32xf32, #tpu.memory_space<vmem>>) attributes {dimension_semantics = [#tpu.dimension_semantics<parallel>, #tpu.dimension_semantics<arbitrary>], iteration_bounds = array<i64: 1, 1>, scalar_prefetch = 0 : i64, scratch_operands = 2 : i64, tpu.core_type = #tpu.core_type<tc>, window_params = [{transform_indices = @transform_0, window_bounds = array<i64: 8, 8, 1>}, {pipeline_mode = #tpu.pipeline_mode<synchronous>, transform_indices = @transform_1, window_bounds = array<i64: 32, 128>}, {pipeline_mode = #tpu.pipeline_mode<synchronous>, transform_indices = @transform_2, window_bounds = array<i64: 32, 128>}, {transform_indices = @transform_3, window_bounds = array<i64: 8, 1>}, {transform_indices = @transform_4, window_bounds = array<i64: 8, 32>}]} {
    %c0_i32 = arith.constant 0 : i32
    %0 = arith.cmpi eq, %arg1, %c0_i32 : i32
    %1 = arith.extui %0 : i1 to i32
    %c0_i32_0 = arith.constant 0 : i32
    %2 = arith.cmpi ne, %1, %c0_i32_0 : i32
    scf.if %2 {
      %cst_73 = arith.constant 0.000000e+00 : f32
      %345 = vector.broadcast %cst_73 : f32 to vector<8x32xf32>
      %c0_74 = arith.constant 0 : index
      %c0_75 = arith.constant 0 : index
      %346 = vector.load %arg7[%c0_74, %c0_75] : memref<8x32xf32, #tpu.memory_space<vmem>>, vector<8x32xf32>
      tpu.vector_store %arg7[%c0_74, %c0_75], %345 {strides = array<i32>} : memref<8x32xf32, #tpu.memory_space<vmem>>, vector<8x32xf32>,
      %cst_76 = arith.constant 0.000000e+00 : f32
      %347 = vector.broadcast %cst_76 : f32 to vector<8x32xf32>
      %c0_77 = arith.constant 0 : index
      %c0_78 = arith.constant 0 : index
      %348 = vector.load %arg8[%c0_77, %c0_78] : memref<8x32xf32, #tpu.memory_space<vmem>>, vector<8x32xf32>
      tpu.vector_store %arg8[%c0_77, %c0_78], %347 {strides = array<i32>} : memref<8x32xf32, #tpu.memory_space<vmem>>, vector<8x32xf32>,
    } else {
    }
    %c0 = arith.constant 0 : index
    %c0_1 = arith.constant 0 : index
    %3 = vector.load %arg3[%c0, %c0_1] : memref<32x128xf32, #tpu.memory_space<vmem>>, vector<32x128xf32>
    %c0_2 = arith.constant 0 : index
    %c0_3 = arith.constant 0 : index
    %4 = vector.load %arg4[%c0_2, %c0_3] : memref<32x128xbf16, #tpu.memory_space<vmem>>, vector<32x128xbf16>
    %c0_4 = arith.constant 0 : index
    %c0_5 = arith.constant 0 : index
    %5 = vector.load %arg5[%c0_4, %c0_5] : memref<8x1xi32, #tpu.memory_space<vmem>>, vector<8x1xi32>
    %6 = vector.shape_cast %5 : vector<8x1xi32> to vector<8x1xi32>
    %7 = vector.broadcast %6 : vector<8x1xi32> to vector<8x32xi32>
    %8 = tpu.iota {dimensions = array<i32: 1>} : vector<8x32xi32>
    %c8_i32 = arith.constant 8 : i32
    %9 = arith.muli %arg1, %c8_i32 : i32
    %c0_6 = arith.constant 0 : index
    %c0_7 = arith.constant 0 : index
    %10 = vector.load %arg7[%c0_6, %c0_7] : memref<8x32xf32, #tpu.memory_space<vmem>>, vector<8x32xf32>
    %c0_8 = arith.constant 0 : index
    %c0_9 = arith.constant 0 : index
    %11 = vector.load %arg8[%c0_8, %c0_9] : memref<8x32xf32, #tpu.memory_space<vmem>>, vector<8x32xf32>
    %c0_i32_10 = arith.constant 0 : i32
    %12 = arith.index_cast %c0_i32_10 : i32 to index
    %c0_11 = arith.constant 0 : index
    %c0_12 = arith.constant 0 : index
    %13 = vector.load %arg2[%12, %c0_11, %c0_12] : memref<8x8x1xi32, #tpu.memory_space<vmem>>, vector<1x8x1xi32>
    %14 = vector.shape_cast %13 : vector<1x8x1xi32> to vector<8x1xi32>
    %15 = vector.broadcast %14 : vector<8x1xi32> to vector<8x32xi32>
    %16 = arith.cmpi eq, %8, %15 : vector<8x32xi32>
    %17 = arith.extui %16 : vector<8x32xi1> to vector<8x32xi32>
    %18 = arith.sitofp %17 : vector<8x32xi32> to vector<8x32xf32>
    %cst = arith.constant dense<0.000000e+00> : vector<8x128xf32>
    %19 = tpu.matmul %18, %3, %cst {dimension_numbers = #tpu.dot_dimension_numbers<[1], [0], [0], [1], [0, 0, 1, 1], [], []>} : vector<8x32xf32>, vector<32x128xf32>, vector<8x128xf32> -> vector<8x128xf32>
    %20 = arith.truncf %10 : vector<8x32xf32> to vector<8x32xbf16>
    %cst_13 = arith.constant dense<0.000000e+00> : vector<8x128xf32>
    %21 = tpu.matmul %20, %4, %cst_13 {dimension_numbers = #tpu.dot_dimension_numbers<[1], [0], [0], [1], [0, 0, 1, 1], [], []>} : vector<8x32xbf16>, vector<32x128xbf16>, vector<8x128xf32> -> vector<8x128xf32>
    %22 = arith.addf %19, %21 : vector<8x128xf32>
    %23 = vector.extract_strided_slice %22 {offsets = [0, 0], sizes = [8, 32], strides = [1, 1]} : vector<8x128xf32> to vector<8x32xf32>
    %24 = arith.negf %23 : vector<8x32xf32>
    %25 = math.exp %24 : vector<8x32xf32>
    %cst_14 = arith.constant 1.000000e+00 : f32
    %26 = vector.broadcast %cst_14 : f32 to vector<8x32xf32>
    %27 = arith.addf %26, %25 : vector<8x32xf32>
    %28 = arith.divf %26, %27 : vector<8x32xf32>
    %29 = vector.extract_strided_slice %22 {offsets = [0, 32], sizes = [8, 32], strides = [1, 1]} : vector<8x128xf32> to vector<8x32xf32>
    %30 = arith.negf %29 : vector<8x32xf32>
    %31 = math.exp %30 : vector<8x32xf32>
    %cst_15 = arith.constant 1.000000e+00 : f32
    %32 = vector.broadcast %cst_15 : f32 to vector<8x32xf32>
    %33 = arith.addf %32, %31 : vector<8x32xf32>
    %34 = arith.divf %32, %33 : vector<8x32xf32>
    %35 = vector.extract_strided_slice %22 {offsets = [0, 64], sizes = [8, 32], strides = [1, 1]} : vector<8x128xf32> to vector<8x32xf32>
    %36 = math.tanh %35 : vector<8x32xf32>
    %37 = vector.extract_strided_slice %22 {offsets = [0, 96], sizes = [8, 32], strides = [1, 1]} : vector<8x128xf32> to vector<8x32xf32>
    %38 = arith.negf %37 : vector<8x32xf32>
    %39 = math.exp %38 : vector<8x32xf32>
    %cst_16 = arith.constant 1.000000e+00 : f32
    %40 = vector.broadcast %cst_16 : f32 to vector<8x32xf32>
    %41 = arith.addf %40, %39 : vector<8x32xf32>
    %42 = arith.divf %40, %41 : vector<8x32xf32>
    %43 = arith.mulf %34, %11 : vector<8x32xf32>
    %44 = arith.mulf %28, %36 : vector<8x32xf32>
    %45 = arith.addf %43, %44 : vector<8x32xf32>
    %46 = math.tanh %45 : vector<8x32xf32>
    %47 = arith.mulf %42, %46 : vector<8x32xf32>
    %48 = arith.addi %9, %c0_i32_10 : i32
    %49 = vector.broadcast %48 : i32 to vector<8x32xi32>
    %50 = arith.cmpi sgt, %7, %49 : vector<8x32xi32>
    %51 = arith.select %50, %47, %10 : vector<8x32xi1>, vector<8x32xf32>
    %52 = arith.select %50, %45, %11 : vector<8x32xi1>, vector<8x32xf32>
    %c1_i32 = arith.constant 1 : i32
    %53 = arith.index_cast %c1_i32 : i32 to index
    %c0_17 = arith.constant 0 : index
    %c0_18 = arith.constant 0 : index
    %54 = vector.load %arg2[%53, %c0_17, %c0_18] : memref<8x8x1xi32, #tpu.memory_space<vmem>>, vector<1x8x1xi32>
    %55 = vector.shape_cast %54 : vector<1x8x1xi32> to vector<8x1xi32>
    %56 = vector.broadcast %55 : vector<8x1xi32> to vector<8x32xi32>
    %57 = arith.cmpi eq, %8, %56 : vector<8x32xi32>
    %58 = arith.extui %57 : vector<8x32xi1> to vector<8x32xi32>
    %59 = arith.sitofp %58 : vector<8x32xi32> to vector<8x32xf32>
    %cst_19 = arith.constant dense<0.000000e+00> : vector<8x128xf32>
    %60 = tpu.matmul %59, %3, %cst_19 {dimension_numbers = #tpu.dot_dimension_numbers<[1], [0], [0], [1], [0, 0, 1, 1], [], []>} : vector<8x32xf32>, vector<32x128xf32>, vector<8x128xf32> -> vector<8x128xf32>
    %61 = arith.truncf %51 : vector<8x32xf32> to vector<8x32xbf16>
    %cst_20 = arith.constant dense<0.000000e+00> : vector<8x128xf32>
    %62 = tpu.matmul %61, %4, %cst_20 {dimension_numbers = #tpu.dot_dimension_numbers<[1], [0], [0], [1], [0, 0, 1, 1], [], []>} : vector<8x32xbf16>, vector<32x128xbf16>, vector<8x128xf32> -> vector<8x128xf32>
    %63 = arith.addf %60, %62 : vector<8x128xf32>
    %64 = vector.extract_strided_slice %63 {offsets = [0, 0], sizes = [8, 32], strides = [1, 1]} : vector<8x128xf32> to vector<8x32xf32>
    %65 = arith.negf %64 : vector<8x32xf32>
    %66 = math.exp %65 : vector<8x32xf32>
    %cst_21 = arith.constant 1.000000e+00 : f32
    %67 = vector.broadcast %cst_21 : f32 to vector<8x32xf32>
    %68 = arith.addf %67, %66 : vector<8x32xf32>
    %69 = arith.divf %67, %68 : vector<8x32xf32>
    %70 = vector.extract_strided_slice %63 {offsets = [0, 32], sizes = [8, 32], strides = [1, 1]} : vector<8x128xf32> to vector<8x32xf32>
    %71 = arith.negf %70 : vector<8x32xf32>
    %72 = math.exp %71 : vector<8x32xf32>
    %cst_22 = arith.constant 1.000000e+00 : f32
    %73 = vector.broadcast %cst_22 : f32 to vector<8x32xf32>
    %74 = arith.addf %73, %72 : vector<8x32xf32>
    %75 = arith.divf %73, %74 : vector<8x32xf32>
    %76 = vector.extract_strided_slice %63 {offsets = [0, 64], sizes = [8, 32], strides = [1, 1]} : vector<8x128xf32> to vector<8x32xf32>
    %77 = math.tanh %76 : vector<8x32xf32>
    %78 = vector.extract_strided_slice %63 {offsets = [0, 96], sizes = [8, 32], strides = [1, 1]} : vector<8x128xf32> to vector<8x32xf32>
    %79 = arith.negf %78 : vector<8x32xf32>
    %80 = math.exp %79 : vector<8x32xf32>
    %cst_23 = arith.constant 1.000000e+00 : f32
    %81 = vector.broadcast %cst_23 : f32 to vector<8x32xf32>
    %82 = arith.addf %81, %80 : vector<8x32xf32>
    %83 = arith.divf %81, %82 : vector<8x32xf32>
    %84 = arith.mulf %75, %52 : vector<8x32xf32>
    %85 = arith.mulf %69, %77 : vector<8x32xf32>
    %86 = arith.addf %84, %85 : vector<8x32xf32>
    %87 = math.tanh %86 : vector<8x32xf32>
    %88 = arith.mulf %83, %87 : vector<8x32xf32>
    %89 = arith.addi %9, %c1_i32 : i32
    %90 = vector.broadcast %89 : i32 to vector<8x32xi32>
    %91 = arith.cmpi sgt, %7, %90 : vector<8x32xi32>
    %92 = arith.select %91, %88, %51 : vector<8x32xi1>, vector<8x32xf32>
    %93 = arith.select %91, %86, %52 : vector<8x32xi1>, vector<8x32xf32>
    %c2_i32 = arith.constant 2 : i32
    %94 = arith.index_cast %c2_i32 : i32 to index
    %c0_24 = arith.constant 0 : index
    %c0_25 = arith.constant 0 : index
    %95 = vector.load %arg2[%94, %c0_24, %c0_25] : memref<8x8x1xi32, #tpu.memory_space<vmem>>, vector<1x8x1xi32>
    %96 = vector.shape_cast %95 : vector<1x8x1xi32> to vector<8x1xi32>
    %97 = vector.broadcast %96 : vector<8x1xi32> to vector<8x32xi32>
    %98 = arith.cmpi eq, %8, %97 : vector<8x32xi32>
    %99 = arith.extui %98 : vector<8x32xi1> to vector<8x32xi32>
    %100 = arith.sitofp %99 : vector<8x32xi32> to vector<8x32xf32>
    %cst_26 = arith.constant dense<0.000000e+00> : vector<8x128xf32>
    %101 = tpu.matmul %100, %3, %cst_26 {dimension_numbers = #tpu.dot_dimension_numbers<[1], [0], [0], [1], [0, 0, 1, 1], [], []>} : vector<8x32xf32>, vector<32x128xf32>, vector<8x128xf32> -> vector<8x128xf32>
    %102 = arith.truncf %92 : vector<8x32xf32> to vector<8x32xbf16>
    %cst_27 = arith.constant dense<0.000000e+00> : vector<8x128xf32>
    %103 = tpu.matmul %102, %4, %cst_27 {dimension_numbers = #tpu.dot_dimension_numbers<[1], [0], [0], [1], [0, 0, 1, 1], [], []>} : vector<8x32xbf16>, vector<32x128xbf16>, vector<8x128xf32> -> vector<8x128xf32>
    %104 = arith.addf %101, %103 : vector<8x128xf32>
    %105 = vector.extract_strided_slice %104 {offsets = [0, 0], sizes = [8, 32], strides = [1, 1]} : vector<8x128xf32> to vector<8x32xf32>
    %106 = arith.negf %105 : vector<8x32xf32>
    %107 = math.exp %106 : vector<8x32xf32>
    %cst_28 = arith.constant 1.000000e+00 : f32
    %108 = vector.broadcast %cst_28 : f32 to vector<8x32xf32>
    %109 = arith.addf %108, %107 : vector<8x32xf32>
    %110 = arith.divf %108, %109 : vector<8x32xf32>
    %111 = vector.extract_strided_slice %104 {offsets = [0, 32], sizes = [8, 32], strides = [1, 1]} : vector<8x128xf32> to vector<8x32xf32>
    %112 = arith.negf %111 : vector<8x32xf32>
    %113 = math.exp %112 : vector<8x32xf32>
    %cst_29 = arith.constant 1.000000e+00 : f32
    %114 = vector.broadcast %cst_29 : f32 to vector<8x32xf32>
    %115 = arith.addf %114, %113 : vector<8x32xf32>
    %116 = arith.divf %114, %115 : vector<8x32xf32>
    %117 = vector.extract_strided_slice %104 {offsets = [0, 64], sizes = [8, 32], strides = [1, 1]} : vector<8x128xf32> to vector<8x32xf32>
    %118 = math.tanh %117 : vector<8x32xf32>
    %119 = vector.extract_strided_slice %104 {offsets = [0, 96], sizes = [8, 32], strides = [1, 1]} : vector<8x128xf32> to vector<8x32xf32>
    %120 = arith.negf %119 : vector<8x32xf32>
    %121 = math.exp %120 : vector<8x32xf32>
    %cst_30 = arith.constant 1.000000e+00 : f32
    %122 = vector.broadcast %cst_30 : f32 to vector<8x32xf32>
    %123 = arith.addf %122, %121 : vector<8x32xf32>
    %124 = arith.divf %122, %123 : vector<8x32xf32>
    %125 = arith.mulf %116, %93 : vector<8x32xf32>
    %126 = arith.mulf %110, %118 : vector<8x32xf32>
    %127 = arith.addf %125, %126 : vector<8x32xf32>
    %128 = math.tanh %127 : vector<8x32xf32>
    %129 = arith.mulf %124, %128 : vector<8x32xf32>
    %130 = arith.addi %9, %c2_i32 : i32
    %131 = vector.broadcast %130 : i32 to vector<8x32xi32>
    %132 = arith.cmpi sgt, %7, %131 : vector<8x32xi32>
    %133 = arith.select %132, %129, %92 : vector<8x32xi1>, vector<8x32xf32>
    %134 = arith.select %132, %127, %93 : vector<8x32xi1>, vector<8x32xf32>
    %c3_i32 = arith.constant 3 : i32
    %135 = arith.index_cast %c3_i32 : i32 to index
    %c0_31 = arith.constant 0 : index
    %c0_32 = arith.constant 0 : index
    %136 = vector.load %arg2[%135, %c0_31, %c0_32] : memref<8x8x1xi32, #tpu.memory_space<vmem>>, vector<1x8x1xi32>
    %137 = vector.shape_cast %136 : vector<1x8x1xi32> to vector<8x1xi32>
    %138 = vector.broadcast %137 : vector<8x1xi32> to vector<8x32xi32>
    %139 = arith.cmpi eq, %8, %138 : vector<8x32xi32>
    %140 = arith.extui %139 : vector<8x32xi1> to vector<8x32xi32>
    %141 = arith.sitofp %140 : vector<8x32xi32> to vector<8x32xf32>
    %cst_33 = arith.constant dense<0.000000e+00> : vector<8x128xf32>
    %142 = tpu.matmul %141, %3, %cst_33 {dimension_numbers = #tpu.dot_dimension_numbers<[1], [0], [0], [1], [0, 0, 1, 1], [], []>} : vector<8x32xf32>, vector<32x128xf32>, vector<8x128xf32> -> vector<8x128xf32>
    %143 = arith.truncf %133 : vector<8x32xf32> to vector<8x32xbf16>
    %cst_34 = arith.constant dense<0.000000e+00> : vector<8x128xf32>
    %144 = tpu.matmul %143, %4, %cst_34 {dimension_numbers = #tpu.dot_dimension_numbers<[1], [0], [0], [1], [0, 0, 1, 1], [], []>} : vector<8x32xbf16>, vector<32x128xbf16>, vector<8x128xf32> -> vector<8x128xf32>
    %145 = arith.addf %142, %144 : vector<8x128xf32>
    %146 = vector.extract_strided_slice %145 {offsets = [0, 0], sizes = [8, 32], strides = [1, 1]} : vector<8x128xf32> to vector<8x32xf32>
    %147 = arith.negf %146 : vector<8x32xf32>
    %148 = math.exp %147 : vector<8x32xf32>
    %cst_35 = arith.constant 1.000000e+00 : f32
    %149 = vector.broadcast %cst_35 : f32 to vector<8x32xf32>
    %150 = arith.addf %149, %148 : vector<8x32xf32>
    %151 = arith.divf %149, %150 : vector<8x32xf32>
    %152 = vector.extract_strided_slice %145 {offsets = [0, 32], sizes = [8, 32], strides = [1, 1]} : vector<8x128xf32> to vector<8x32xf32>
    %153 = arith.negf %152 : vector<8x32xf32>
    %154 = math.exp %153 : vector<8x32xf32>
    %cst_36 = arith.constant 1.000000e+00 : f32
    %155 = vector.broadcast %cst_36 : f32 to vector<8x32xf32>
    %156 = arith.addf %155, %154 : vector<8x32xf32>
    %157 = arith.divf %155, %156 : vector<8x32xf32>
    %158 = vector.extract_strided_slice %145 {offsets = [0, 64], sizes = [8, 32], strides = [1, 1]} : vector<8x128xf32> to vector<8x32xf32>
    %159 = math.tanh %158 : vector<8x32xf32>
    %160 = vector.extract_strided_slice %145 {offsets = [0, 96], sizes = [8, 32], strides = [1, 1]} : vector<8x128xf32> to vector<8x32xf32>
    %161 = arith.negf %160 : vector<8x32xf32>
    %162 = math.exp %161 : vector<8x32xf32>
    %cst_37 = arith.constant 1.000000e+00 : f32
    %163 = vector.broadcast %cst_37 : f32 to vector<8x32xf32>
    %164 = arith.addf %163, %162 : vector<8x32xf32>
    %165 = arith.divf %163, %164 : vector<8x32xf32>
    %166 = arith.mulf %157, %134 : vector<8x32xf32>
    %167 = arith.mulf %151, %159 : vector<8x32xf32>
    %168 = arith.addf %166, %167 : vector<8x32xf32>
    %169 = math.tanh %168 : vector<8x32xf32>
    %170 = arith.mulf %165, %169 : vector<8x32xf32>
    %171 = arith.addi %9, %c3_i32 : i32
    %172 = vector.broadcast %171 : i32 to vector<8x32xi32>
    %173 = arith.cmpi sgt, %7, %172 : vector<8x32xi32>
    %174 = arith.select %173, %170, %133 : vector<8x32xi1>, vector<8x32xf32>
    %175 = arith.select %173, %168, %134 : vector<8x32xi1>, vector<8x32xf32>
    %c4_i32 = arith.constant 4 : i32
    %176 = arith.index_cast %c4_i32 : i32 to index
    %c0_38 = arith.constant 0 : index
    %c0_39 = arith.constant 0 : index
    %177 = vector.load %arg2[%176, %c0_38, %c0_39] : memref<8x8x1xi32, #tpu.memory_space<vmem>>, vector<1x8x1xi32>
    %178 = vector.shape_cast %177 : vector<1x8x1xi32> to vector<8x1xi32>
    %179 = vector.broadcast %178 : vector<8x1xi32> to vector<8x32xi32>
    %180 = arith.cmpi eq, %8, %179 : vector<8x32xi32>
    %181 = arith.extui %180 : vector<8x32xi1> to vector<8x32xi32>
    %182 = arith.sitofp %181 : vector<8x32xi32> to vector<8x32xf32>
    %cst_40 = arith.constant dense<0.000000e+00> : vector<8x128xf32>
    %183 = tpu.matmul %182, %3, %cst_40 {dimension_numbers = #tpu.dot_dimension_numbers<[1], [0], [0], [1], [0, 0, 1, 1], [], []>} : vector<8x32xf32>, vector<32x128xf32>, vector<8x128xf32> -> vector<8x128xf32>
    %184 = arith.truncf %174 : vector<8x32xf32> to vector<8x32xbf16>
    %cst_41 = arith.constant dense<0.000000e+00> : vector<8x128xf32>
    %185 = tpu.matmul %184, %4, %cst_41 {dimension_numbers = #tpu.dot_dimension_numbers<[1], [0], [0], [1], [0, 0, 1, 1], [], []>} : vector<8x32xbf16>, vector<32x128xbf16>, vector<8x128xf32> -> vector<8x128xf32>
    %186 = arith.addf %183, %185 : vector<8x128xf32>
    %187 = vector.extract_strided_slice %186 {offsets = [0, 0], sizes = [8, 32], strides = [1, 1]} : vector<8x128xf32> to vector<8x32xf32>
    %188 = arith.negf %187 : vector<8x32xf32>
    %189 = math.exp %188 : vector<8x32xf32>
    %cst_42 = arith.constant 1.000000e+00 : f32
    %190 = vector.broadcast %cst_42 : f32 to vector<8x32xf32>
    %191 = arith.addf %190, %189 : vector<8x32xf32>
    %192 = arith.divf %190, %191 : vector<8x32xf32>
    %193 = vector.extract_strided_slice %186 {offsets = [0, 32], sizes = [8, 32], strides = [1, 1]} : vector<8x128xf32> to vector<8x32xf32>
    %194 = arith.negf %193 : vector<8x32xf32>
    %195 = math.exp %194 : vector<8x32xf32>
    %cst_43 = arith.constant 1.000000e+00 : f32
    %196 = vector.broadcast %cst_43 : f32 to vector<8x32xf32>
    %197 = arith.addf %196, %195 : vector<8x32xf32>
    %198 = arith.divf %196, %197 : vector<8x32xf32>
    %199 = vector.extract_strided_slice %186 {offsets = [0, 64], sizes = [8, 32], strides = [1, 1]} : vector<8x128xf32> to vector<8x32xf32>
    %200 = math.tanh %199 : vector<8x32xf32>
    %201 = vector.extract_strided_slice %186 {offsets = [0, 96], sizes = [8, 32], strides = [1, 1]} : vector<8x128xf32> to vector<8x32xf32>
    %202 = arith.negf %201 : vector<8x32xf32>
    %203 = math.exp %202 : vector<8x32xf32>
    %cst_44 = arith.constant 1.000000e+00 : f32
    %204 = vector.broadcast %cst_44 : f32 to vector<8x32xf32>
    %205 = arith.addf %204, %203 : vector<8x32xf32>
    %206 = arith.divf %204, %205 : vector<8x32xf32>
    %207 = arith.mulf %198, %175 : vector<8x32xf32>
    %208 = arith.mulf %192, %200 : vector<8x32xf32>
    %209 = arith.addf %207, %208 : vector<8x32xf32>
    %210 = math.tanh %209 : vector<8x32xf32>
    %211 = arith.mulf %206, %210 : vector<8x32xf32>
    %212 = arith.addi %9, %c4_i32 : i32
    %213 = vector.broadcast %212 : i32 to vector<8x32xi32>
    %214 = arith.cmpi sgt, %7, %213 : vector<8x32xi32>
    %215 = arith.select %214, %211, %174 : vector<8x32xi1>, vector<8x32xf32>
    %216 = arith.select %214, %209, %175 : vector<8x32xi1>, vector<8x32xf32>
    %c5_i32 = arith.constant 5 : i32
    %217 = arith.index_cast %c5_i32 : i32 to index
    %c0_45 = arith.constant 0 : index
    %c0_46 = arith.constant 0 : index
    %218 = vector.load %arg2[%217, %c0_45, %c0_46] : memref<8x8x1xi32, #tpu.memory_space<vmem>>, vector<1x8x1xi32>
    %219 = vector.shape_cast %218 : vector<1x8x1xi32> to vector<8x1xi32>
    %220 = vector.broadcast %219 : vector<8x1xi32> to vector<8x32xi32>
    %221 = arith.cmpi eq, %8, %220 : vector<8x32xi32>
    %222 = arith.extui %221 : vector<8x32xi1> to vector<8x32xi32>
    %223 = arith.sitofp %222 : vector<8x32xi32> to vector<8x32xf32>
    %cst_47 = arith.constant dense<0.000000e+00> : vector<8x128xf32>
    %224 = tpu.matmul %223, %3, %cst_47 {dimension_numbers = #tpu.dot_dimension_numbers<[1], [0], [0], [1], [0, 0, 1, 1], [], []>} : vector<8x32xf32>, vector<32x128xf32>, vector<8x128xf32> -> vector<8x128xf32>
    %225 = arith.truncf %215 : vector<8x32xf32> to vector<8x32xbf16>
    %cst_48 = arith.constant dense<0.000000e+00> : vector<8x128xf32>
    %226 = tpu.matmul %225, %4, %cst_48 {dimension_numbers = #tpu.dot_dimension_numbers<[1], [0], [0], [1], [0, 0, 1, 1], [], []>} : vector<8x32xbf16>, vector<32x128xbf16>, vector<8x128xf32> -> vector<8x128xf32>
    %227 = arith.addf %224, %226 : vector<8x128xf32>
    %228 = vector.extract_strided_slice %227 {offsets = [0, 0], sizes = [8, 32], strides = [1, 1]} : vector<8x128xf32> to vector<8x32xf32>
    %229 = arith.negf %228 : vector<8x32xf32>
    %230 = math.exp %229 : vector<8x32xf32>
    %cst_49 = arith.constant 1.000000e+00 : f32
    %231 = vector.broadcast %cst_49 : f32 to vector<8x32xf32>
    %232 = arith.addf %231, %230 : vector<8x32xf32>
    %233 = arith.divf %231, %232 : vector<8x32xf32>
    %234 = vector.extract_strided_slice %227 {offsets = [0, 32], sizes = [8, 32], strides = [1, 1]} : vector<8x128xf32> to vector<8x32xf32>
    %235 = arith.negf %234 : vector<8x32xf32>
    %236 = math.exp %235 : vector<8x32xf32>
    %cst_50 = arith.constant 1.000000e+00 : f32
    %237 = vector.broadcast %cst_50 : f32 to vector<8x32xf32>
    %238 = arith.addf %237, %236 : vector<8x32xf32>
    %239 = arith.divf %237, %238 : vector<8x32xf32>
    %240 = vector.extract_strided_slice %227 {offsets = [0, 64], sizes = [8, 32], strides = [1, 1]} : vector<8x128xf32> to vector<8x32xf32>
    %241 = math.tanh %240 : vector<8x32xf32>
    %242 = vector.extract_strided_slice %227 {offsets = [0, 96], sizes = [8, 32], strides = [1, 1]} : vector<8x128xf32> to vector<8x32xf32>
    %243 = arith.negf %242 : vector<8x32xf32>
    %244 = math.exp %243 : vector<8x32xf32>
    %cst_51 = arith.constant 1.000000e+00 : f32
    %245 = vector.broadcast %cst_51 : f32 to vector<8x32xf32>
    %246 = arith.addf %245, %244 : vector<8x32xf32>
    %247 = arith.divf %245, %246 : vector<8x32xf32>
    %248 = arith.mulf %239, %216 : vector<8x32xf32>
    %249 = arith.mulf %233, %241 : vector<8x32xf32>
    %250 = arith.addf %248, %249 : vector<8x32xf32>
    %251 = math.tanh %250 : vector<8x32xf32>
    %252 = arith.mulf %247, %251 : vector<8x32xf32>
    %253 = arith.addi %9, %c5_i32 : i32
    %254 = vector.broadcast %253 : i32 to vector<8x32xi32>
    %255 = arith.cmpi sgt, %7, %254 : vector<8x32xi32>
    %256 = arith.select %255, %252, %215 : vector<8x32xi1>, vector<8x32xf32>
    %257 = arith.select %255, %250, %216 : vector<8x32xi1>, vector<8x32xf32>
    %c6_i32 = arith.constant 6 : i32
    %258 = arith.index_cast %c6_i32 : i32 to index
    %c0_52 = arith.constant 0 : index
    %c0_53 = arith.constant 0 : index
    %259 = vector.load %arg2[%258, %c0_52, %c0_53] : memref<8x8x1xi32, #tpu.memory_space<vmem>>, vector<1x8x1xi32>
    %260 = vector.shape_cast %259 : vector<1x8x1xi32> to vector<8x1xi32>
    %261 = vector.broadcast %260 : vector<8x1xi32> to vector<8x32xi32>
    %262 = arith.cmpi eq, %8, %261 : vector<8x32xi32>
    %263 = arith.extui %262 : vector<8x32xi1> to vector<8x32xi32>
    %264 = arith.sitofp %263 : vector<8x32xi32> to vector<8x32xf32>
    %cst_54 = arith.constant dense<0.000000e+00> : vector<8x128xf32>
    %265 = tpu.matmul %264, %3, %cst_54 {dimension_numbers = #tpu.dot_dimension_numbers<[1], [0], [0], [1], [0, 0, 1, 1], [], []>} : vector<8x32xf32>, vector<32x128xf32>, vector<8x128xf32> -> vector<8x128xf32>
    %266 = arith.truncf %256 : vector<8x32xf32> to vector<8x32xbf16>
    %cst_55 = arith.constant dense<0.000000e+00> : vector<8x128xf32>
    %267 = tpu.matmul %266, %4, %cst_55 {dimension_numbers = #tpu.dot_dimension_numbers<[1], [0], [0], [1], [0, 0, 1, 1], [], []>} : vector<8x32xbf16>, vector<32x128xbf16>, vector<8x128xf32> -> vector<8x128xf32>
    %268 = arith.addf %265, %267 : vector<8x128xf32>
    %269 = vector.extract_strided_slice %268 {offsets = [0, 0], sizes = [8, 32], strides = [1, 1]} : vector<8x128xf32> to vector<8x32xf32>
    %270 = arith.negf %269 : vector<8x32xf32>
    %271 = math.exp %270 : vector<8x32xf32>
    %cst_56 = arith.constant 1.000000e+00 : f32
    %272 = vector.broadcast %cst_56 : f32 to vector<8x32xf32>
    %273 = arith.addf %272, %271 : vector<8x32xf32>
    %274 = arith.divf %272, %273 : vector<8x32xf32>
    %275 = vector.extract_strided_slice %268 {offsets = [0, 32], sizes = [8, 32], strides = [1, 1]} : vector<8x128xf32> to vector<8x32xf32>
    %276 = arith.negf %275 : vector<8x32xf32>
    %277 = math.exp %276 : vector<8x32xf32>
    %cst_57 = arith.constant 1.000000e+00 : f32
    %278 = vector.broadcast %cst_57 : f32 to vector<8x32xf32>
    %279 = arith.addf %278, %277 : vector<8x32xf32>
    %280 = arith.divf %278, %279 : vector<8x32xf32>
    %281 = vector.extract_strided_slice %268 {offsets = [0, 64], sizes = [8, 32], strides = [1, 1]} : vector<8x128xf32> to vector<8x32xf32>
    %282 = math.tanh %281 : vector<8x32xf32>
    %283 = vector.extract_strided_slice %268 {offsets = [0, 96], sizes = [8, 32], strides = [1, 1]} : vector<8x128xf32> to vector<8x32xf32>
    %284 = arith.negf %283 : vector<8x32xf32>
    %285 = math.exp %284 : vector<8x32xf32>
    %cst_58 = arith.constant 1.000000e+00 : f32
    %286 = vector.broadcast %cst_58 : f32 to vector<8x32xf32>
    %287 = arith.addf %286, %285 : vector<8x32xf32>
    %288 = arith.divf %286, %287 : vector<8x32xf32>
    %289 = arith.mulf %280, %257 : vector<8x32xf32>
    %290 = arith.mulf %274, %282 : vector<8x32xf32>
    %291 = arith.addf %289, %290 : vector<8x32xf32>
    %292 = math.tanh %291 : vector<8x32xf32>
    %293 = arith.mulf %288, %292 : vector<8x32xf32>
    %294 = arith.addi %9, %c6_i32 : i32
    %295 = vector.broadcast %294 : i32 to vector<8x32xi32>
    %296 = arith.cmpi sgt, %7, %295 : vector<8x32xi32>
    %297 = arith.select %296, %293, %256 : vector<8x32xi1>, vector<8x32xf32>
    %298 = arith.select %296, %291, %257 : vector<8x32xi1>, vector<8x32xf32>
    %c7_i32 = arith.constant 7 : i32
    %299 = arith.index_cast %c7_i32 : i32 to index
    %c0_59 = arith.constant 0 : index
    %c0_60 = arith.constant 0 : index
    %300 = vector.load %arg2[%299, %c0_59, %c0_60] : memref<8x8x1xi32, #tpu.memory_space<vmem>>, vector<1x8x1xi32>
    %301 = vector.shape_cast %300 : vector<1x8x1xi32> to vector<8x1xi32>
    %302 = vector.broadcast %301 : vector<8x1xi32> to vector<8x32xi32>
    %303 = arith.cmpi eq, %8, %302 : vector<8x32xi32>
    %304 = arith.extui %303 : vector<8x32xi1> to vector<8x32xi32>
    %305 = arith.sitofp %304 : vector<8x32xi32> to vector<8x32xf32>
    %cst_61 = arith.constant dense<0.000000e+00> : vector<8x128xf32>
    %306 = tpu.matmul %305, %3, %cst_61 {dimension_numbers = #tpu.dot_dimension_numbers<[1], [0], [0], [1], [0, 0, 1, 1], [], []>} : vector<8x32xf32>, vector<32x128xf32>, vector<8x128xf32> -> vector<8x128xf32>
    %307 = arith.truncf %297 : vector<8x32xf32> to vector<8x32xbf16>
    %cst_62 = arith.constant dense<0.000000e+00> : vector<8x128xf32>
    %308 = tpu.matmul %307, %4, %cst_62 {dimension_numbers = #tpu.dot_dimension_numbers<[1], [0], [0], [1], [0, 0, 1, 1], [], []>} : vector<8x32xbf16>, vector<32x128xbf16>, vector<8x128xf32> -> vector<8x128xf32>
    %309 = arith.addf %306, %308 : vector<8x128xf32>
    %310 = vector.extract_strided_slice %309 {offsets = [0, 0], sizes = [8, 32], strides = [1, 1]} : vector<8x128xf32> to vector<8x32xf32>
    %311 = arith.negf %310 : vector<8x32xf32>
    %312 = math.exp %311 : vector<8x32xf32>
    %cst_63 = arith.constant 1.000000e+00 : f32
    %313 = vector.broadcast %cst_63 : f32 to vector<8x32xf32>
    %314 = arith.addf %313, %312 : vector<8x32xf32>
    %315 = arith.divf %313, %314 : vector<8x32xf32>
    %316 = vector.extract_strided_slice %309 {offsets = [0, 32], sizes = [8, 32], strides = [1, 1]} : vector<8x128xf32> to vector<8x32xf32>
    %317 = arith.negf %316 : vector<8x32xf32>
    %318 = math.exp %317 : vector<8x32xf32>
    %cst_64 = arith.constant 1.000000e+00 : f32
    %319 = vector.broadcast %cst_64 : f32 to vector<8x32xf32>
    %320 = arith.addf %319, %318 : vector<8x32xf32>
    %321 = arith.divf %319, %320 : vector<8x32xf32>
    %322 = vector.extract_strided_slice %309 {offsets = [0, 64], sizes = [8, 32], strides = [1, 1]} : vector<8x128xf32> to vector<8x32xf32>
    %323 = math.tanh %322 : vector<8x32xf32>
    %324 = vector.extract_strided_slice %309 {offsets = [0, 96], sizes = [8, 32], strides = [1, 1]} : vector<8x128xf32> to vector<8x32xf32>
    %325 = arith.negf %324 : vector<8x32xf32>
    %326 = math.exp %325 : vector<8x32xf32>
    %cst_65 = arith.constant 1.000000e+00 : f32
    %327 = vector.broadcast %cst_65 : f32 to vector<8x32xf32>
    %328 = arith.addf %327, %326 : vector<8x32xf32>
    %329 = arith.divf %327, %328 : vector<8x32xf32>
    %330 = arith.mulf %321, %298 : vector<8x32xf32>
    %331 = arith.mulf %315, %323 : vector<8x32xf32>
    %332 = arith.addf %330, %331 : vector<8x32xf32>
    %333 = math.tanh %332 : vector<8x32xf32>
    %334 = arith.mulf %329, %333 : vector<8x32xf32>
    %335 = arith.addi %9, %c7_i32 : i32
    %336 = vector.broadcast %335 : i32 to vector<8x32xi32>
    %337 = arith.cmpi sgt, %7, %336 : vector<8x32xi32>
    %338 = arith.select %337, %334, %297 : vector<8x32xi1>, vector<8x32xf32>
    %339 = arith.select %337, %332, %298 : vector<8x32xi1>, vector<8x32xf32>
    %c8_i32_66 = arith.constant 8 : i32
    %c0_67 = arith.constant 0 : index
    %c0_68 = arith.constant 0 : index
    %340 = vector.load %arg7[%c0_67, %c0_68] : memref<8x32xf32, #tpu.memory_space<vmem>>, vector<8x32xf32>
    tpu.vector_store %arg7[%c0_67, %c0_68], %338 {strides = array<i32>} : memref<8x32xf32, #tpu.memory_space<vmem>>, vector<8x32xf32>,
    %c0_69 = arith.constant 0 : index
    %c0_70 = arith.constant 0 : index
    %341 = vector.load %arg8[%c0_69, %c0_70] : memref<8x32xf32, #tpu.memory_space<vmem>>, vector<8x32xf32>
    tpu.vector_store %arg8[%c0_69, %c0_70], %339 {strides = array<i32>} : memref<8x32xf32, #tpu.memory_space<vmem>>, vector<8x32xf32>,
    %c0_i32_71 = arith.constant 0 : i32
    %342 = arith.cmpi eq, %arg1, %c0_i32_71 : i32
    %343 = arith.extui %342 : i1 to i32
    %c0_i32_72 = arith.constant 0 : i32
    %344 = arith.cmpi ne, %343, %c0_i32_72 : i32
    scf.if %344 {
      %c0_73 = arith.constant 0 : index
      %c0_74 = arith.constant 0 : index
      %345 = vector.load %arg6[%c0_73, %c0_74] : memref<8x32xf32, #tpu.memory_space<vmem>>, vector<8x32xf32>
      tpu.vector_store %arg6[%c0_73, %c0_74], %338 {strides = array<i32>} : memref<8x32xf32, #tpu.memory_space<vmem>>, vector<8x32xf32>,
    } else {
    }
    return
  }
  func.func @transform_0(%arg0: i32, %arg1: i32) -> (i32, i32, i32) {
    %c0_i32 = arith.constant 0 : i32
    %c0_i32_0 = arith.constant 0 : i32
    return %arg1, %arg0, %c0_i32 : i32, i32, i32
  }
  func.func @transform_1(%arg0: i32, %arg1: i32) -> (i32, i32) {
    %c0_i32 = arith.constant 0 : i32
    %c0_i32_0 = arith.constant 0 : i32
    %c0_i32_1 = arith.constant 0 : i32
    return %c0_i32, %c0_i32_0 : i32, i32
  }
  func.func @transform_2(%arg0: i32, %arg1: i32) -> (i32, i32) {
    %c0_i32 = arith.constant 0 : i32
    %c0_i32_0 = arith.constant 0 : i32
    %c0_i32_1 = arith.constant 0 : i32
    return %c0_i32, %c0_i32_0 : i32, i32
  }
  func.func @transform_3(%arg0: i32, %arg1: i32) -> (i32, i32) {
    %c0_i32 = arith.constant 0 : i32
    %c0_i32_0 = arith.constant 0 : i32
    return %arg0, %c0_i32 : i32, i32
  }
  func.func @transform_4(%arg0: i32, %arg1: i32) -> (i32, i32) {
    %c0_i32 = arith.constant 0 : i32
    %c0_i32_0 = arith.constant 0 : i32
    return %arg0, %c0_i32 : i32, i32
  }
}

</mosaic_0001>

<llo_original>
// kernel: tpu_custom_call.1
$region0: #{tpu_custom_call.1}
  #allocation0 [shape = 'u32[]', space=smem, size = 0x4, offset = 0x4, fixed_abs, tag = 'smem constant byte address 0x4 - core index']
  #allocation1 [shape = 'u32[144,128]{1,0:T(1,128)}', space=vmem, size = 0x12000, scoped, tag = 'internal scratch']
  #allocation2 [shape = 'f32[8,32]{1,0:T(8,128)}', space=vmem, size = 0x1000, scoped, tag = 'scratch operand']
  #allocation3 [shape = 'f32[8,32]{1,0:T(8,128)}', space=vmem, size = 0x1000, scoped, tag = 'scratch operand']
  %s0 = inlined_call_operand.vmem [shape: s32[8,8,1], index: 0, kind: input, shape index: {}]
  %s1 = inlined_call_operand.vmem [shape: f32[32,128], index: 1, kind: input, shape index: {}]
  %s2 = inlined_call_operand.vmem [shape: bf16[32,128], index: 2, kind: input, shape index: {}]
  %s3 = inlined_call_operand.vmem [shape: s32[8,1], index: 3, kind: input, shape index: {}]
  %s4 = inlined_call_operand.hbm [shape: f32[8,32], index: 4, kind: output, shape index: {}]
  %s5 = sld [smem:[#allocation0]]
  $region34: #{tpu_custom_call.1} parent=0
    _
  %s7 = ssub.s32 1, %s5
  %s8 = scalar_select 0, %s7, %s5
  $region1: #{tpu_custom_call.1} parent=0
    #allocation4 [shape = 'u8[4096]{0}', space=vmem, size = 0x1000, scoped, tag = 'output window, operand 0, single buffered']
    #allocation5 [shape = 's32[1]{0}', space=sflag, size = 0x4, scoped, tag = 'scoped memory for tpu_custom_call.1']
    %9 = vsyncpa [#allocation5], 0
    // Predicated region
    $region2: #{tpu_custom_call.1} parent=1 // pred_check
      _
    $region3: #{tpu_custom_call.1} parent=1 // pred_check_branch
      %11 = sbr.rel (0) target = $region5
    $region4: #{tpu_custom_call.1} parent=1 // pred_region
      _
    $region5: #{tpu_custom_call.1} parent=1 // pred_fallthru
      _
    // Predicated region
    $region6: #{tpu_custom_call.1} parent=1 // pred_check
      _
    $region7: #{tpu_custom_call.1} parent=1 // pred_check_branch
      %13 = sbr.rel (0) target = $region9
    $region8: #{tpu_custom_call.1} parent=1 // pred_region
      _
    $region9: #{tpu_custom_call.1} parent=1 // pred_fallthru
      _
    // Predicated region
    $region10: #{tpu_custom_call.1} parent=1 // pred_check
      _
    $region11: #{tpu_custom_call.1} parent=1 // pred_check_branch
      %15 = sbr.rel (0) target = $region13
    $region12: #{tpu_custom_call.1} parent=1 // pred_region
      _
    $region13: #{tpu_custom_call.1} parent=1 // pred_fallthru
      _
    // Predicated region
    $region14: #{tpu_custom_call.1} parent=1 // pred_check
      _
    $region15: #{tpu_custom_call.1} parent=1 // pred_check_branch
      %17 = sbr.rel (0) target = $region17
    $region16: #{tpu_custom_call.1} parent=1 // pred_region
      _
    $region17: #{tpu_custom_call.1} parent=1 // pred_fallthru
      _
    %p19 = scmp.eq.s32.totalorder 0, 0
    // Predicated region
    $region18: #{tpu_custom_call.1} parent=1 // pred_check
      %p20 = pneg %p19
    $region19: #{tpu_custom_call.1} parent=1 // pred_check_branch
      %22 = sbr.rel (%p20) target = $region21
    $region20: #{tpu_custom_call.1} parent=1 // pred_region
      %vm23 = vcmask 261120
      %24 = vst.msk [vmem:[#allocation2] sm:$0xff] %vm23, 0.0
      %25 = vst.msk [vmem:[#allocation3] sm:$0xff] %vm23, 0.0
    $region21: #{tpu_custom_call.1} parent=1 // pred_fallthru
      _
    %v26 = vld [vmem:[%s1] sm:$0xff]
    %v27 = vld [vmem:[%s1 + $0x8] sm:$0xff]
    %v28 = vld [vmem:[%s1 + $0x10] sm:$0xff]
    %v29 = vld [vmem:[%s1 + $0x18] sm:$0xff]
    %v30 = vld [vmem:[%s2] sm:$0xf]
    %v31 = vld [vmem:[%s2 + $0x4] sm:$0xf]
    %v32 = vld [vmem:[%s2 + $0x8] sm:$0xf]
    %v33 = vld [vmem:[%s2 + $0xc] sm:$0xf]
    %v34 = vld [vmem:[%s3] sm:$0xff]
    %35 = vset.pattern.permute.xlu0 0
    %36 = vperm.xlu0 %35, %v34
    %v37 = vpop.permute.xlu0 %36
    %v38 = vlaneseq
    %v39 = vand.u32 %v38, 127
    %s40 = smul.u32 0, 8
    %v41 = vld [vmem:[#allocation2] sm:$0xff]
    %v42 = vld [vmem:[#allocation3] sm:$0xff]
    %v43 = vld [vmem:[%s0] sm:$0xff]
    %44 = vset.pattern.permute.xlu0 0
    %45 = vperm.xlu0 %44, %v43
    %v46 = vpop.permute.xlu0 %45
    %vm47 = vcmp.eq.s32.totalorder %v39, %v46
    %v48 = vsel %vm47, 1, 0
    %v49 = vcvt.s32.f32 %v48
    %v50 = vpack.c.bf16 %v41, %v41
    %v55 = vunpack.c.l.b16 %v30
    %v56 = vunpack.c.l.b16 %v31
    %v57 = vunpack.c.l.b16 %v32
    %v58 = vunpack.c.l.b16 %v33
    %v59 = vpack.c.b16 %v56, %v55
    %v60 = vpack.c.b16 %v58, %v57
    %vm63 = vcmask 261120
    %v65 = vsel %vm63, %v50, 0
    %67 = vmatprep.subr.bf16.mxu0 0
    %68 = vmatpush1.bf16.msra.mxu0 %v59
    %69 = vmatprep.subr.bf16.mxu0 0
    %70 = vmatpush1.bf16.msra.mxu0 %v60
    %71 = vmatprep.subr.bf16.mxu0 0
    %72 = vmatpush1.bf16.msra.mxu0 0
    %73 = vmatprep.subr.bf16.mxu0 0
    %74 = vmatpush1.bf16.msra.mxu0 0
    %75 = vmatprep.subr.bf16.mxu0 0
    %76 = vmatpush1.bf16.msra.mxu0 0
    %77 = vmatprep.subr.bf16.mxu0 0
    %78 = vmatpush1.bf16.msra.mxu0 0
    %79 = vmatprep.subr.bf16.mxu0 0
    %80 = vmatpush1.bf16.msra.mxu0 0
    %81 = vmatprep.subr.bf16.mxu0 0
    %82 = vmatpush1.bf16.msra.mxu0 0
    %83 = vmatprep.subr.bf16.mxu0 0
    %84 = vmatpush1.bf16.msra.mxu0 0
    %85 = vmatprep.subr.bf16.mxu0 0
    %86 = vmatpush1.bf16.msra.mxu0 0
    %87 = vmatprep.subr.bf16.mxu0 0
    %88 = vmatpush1.bf16.msra.mxu0 0
    %89 = vmatprep.subr.bf16.mxu0 0
    %90 = vmatpush1.bf16.msra.mxu0 0
    %91 = vmatprep.subr.bf16.mxu0 0
    %92 = vmatpush1.bf16.msra.mxu0 0
    %93 = vmatprep.subr.bf16.mxu0 0
    %94 = vmatpush1.bf16.msra.mxu0 0
    %95 = vmatprep.subr.bf16.mxu0 0
    %96 = vmatpush1.bf16.msra.mxu0 0
    %97 = vmatprep.subr.bf16.mxu0 0
    %98 = vmatpush1.bf16.msra.mxu0 0
    %99 = vmatprep.mubr.bf16.mxu0 0
    %100 = vmatmul.mubr.bf16.gmra.mrb[0].mxu0 %v65
    %v101 = vpop.f32.mrb[0].mxu0
    %v102 = vadd.f32 0.0, %v101
    %v103 = vpop.f32.mrb[0].mxu0
    %v104 = vpop.f32.mrb[0].mxu0
    %v105 = vpop.f32.mrb[0].mxu0
    %106 = vdwg.mxu0
    %v108 = vsel %vm63, %v49, 0
    %110 = vmatprep.subr.mxu0 0.0
    %111 = vmatpush1.msra.mxu0 %v26
    %112 = vmatprep.subr.mxu0 0.0
    %113 = vmatpush1.msra.mxu0 %v27
    %114 = vmatprep.subr.mxu0 0.0
    %115 = vmatpush1.msra.mxu0 %v28
    %116 = vmatprep.subr.mxu0 0.0
    %117 = vmatpush1.msra.mxu0 %v29
    %118 = vmatprep.subr.mxu0 0.0
    %119 = vmatpush1.msra.mxu0 0.0
    %120 = vmatprep.subr.mxu0 0.0
    %121 = vmatpush1.msra.mxu0 0.0
    %122 = vmatprep.subr.mxu0 0.0
    %123 = vmatpush1.msra.mxu0 0.0
    %124 = vmatprep.subr.mxu0 0.0
    %125 = vmatpush1.msra.mxu0 0.0
    %126 = vmatprep.subr.mxu0 0.0
    %127 = vmatpush1.msra.mxu0 0.0
    %128 = vmatprep.subr.mxu0 0.0
    %129 = vmatpush1.msra.mxu0 0.0
    %130 = vmatprep.subr.mxu0 0.0
    %131 = vmatpush1.msra.mxu0 0.0
    %132 = vmatprep.subr.mxu0 0.0
    %133 = vmatpush1.msra.mxu0 0.0
    %134 = vmatprep.subr.mxu0 0.0
    %135 = vmatpush1.msra.mxu0 0.0
    %136 = vmatprep.subr.mxu0 0.0
    %137 = vmatpush1.msra.mxu0 0.0
    %138 = vmatprep.subr.mxu0 0.0
    %139 = vmatpush1.msra.mxu0 0.0
    %140 = vmatprep.subr.mxu0 0.0
    %141 = vmatpush1.msra.mxu0 0.0
    %142 = vmatprep.subr.mxu0 0.0
    %143 = vmatpush1.msra.mxu0 0.0
    %144 = vmatprep.subr.mxu0 0.0
    %145 = vmatpush1.msra.mxu0 0.0
    %146 = vmatprep.subr.mxu0 0.0
    %147 = vmatpush1.msra.mxu0 0.0
    %148 = vmatprep.subr.mxu0 0.0
    %149 = vmatpush1.msra.mxu0 0.0
    %150 = vmatprep.subr.mxu0 0.0
    %151 = vmatpush1.msra.mxu0 0.0
    %152 = vmatprep.subr.mxu0 0.0
    %153 = vmatpush1.msra.mxu0 0.0
    %154 = vmatprep.subr.mxu0 0.0
    %155 = vmatpush1.msra.mxu0 0.0
    %156 = vmatprep.subr.mxu0 0.0
    %157 = vmatpush1.msra.mxu0 0.0
    %158 = vmatprep.subr.mxu0 0.0
    %159 = vmatpush1.msra.mxu0 0.0
    %160 = vmatprep.subr.mxu0 0.0
    %161 = vmatpush1.msra.mxu0 0.0
    %162 = vmatprep.subr.mxu0 0.0
    %163 = vmatpush1.msra.mxu0 0.0
    %164 = vmatprep.subr.mxu0 0.0
    %165 = vmatpush1.msra.mxu0 0.0
    %166 = vmatprep.subr.mxu0 0.0
    %167 = vmatpush1.msra.mxu0 0.0
    %168 = vmatprep.subr.mxu0 0.0
    %169 = vmatpush1.msra.mxu0 0.0
    %170 = vmatprep.subr.mxu0 0.0
    %171 = vmatpush1.msra.mxu0 0.0
    %172 = vmatprep.subr.mxu0 0.0
    %173 = vmatpush1.msra.mxu0 0.0
    %174 = vmatprep.mubr.f32.mxu0 0.0
    %175 = vmatmul.mubr.f32.gmra.mrb[0].mxu0 %v108
    %v176 = vpop.f32.mrb[0].mxu0
    %v177 = vadd.f32 %v102, %v176
    %v178 = vpop.f32.mrb[0].mxu0
    %179 = vdwg.mxu0
    %v180 = vxor.u32 %v177, 2147483648
    %v181 = vmul.f32 %v180, 1.442695
    %v182 = vpow.pop %v181
    %v183 = vadd.f32 %v182, 1.0
    %v184 = vrcp.pop %v183
    %v185 = vmul.f32 1.0, %v184
    %v186 = vtanh.pop %v177
    %188 = vrot.lane.b32.xlu0 %v42, 32
    %v189 = vpop.permute.xlu0 %188
    %v191 = vmul.f32 %v185, %v189
    %193 = vrot.lane.b32.xlu0 %v186, 64
    %v194 = vpop.permute.xlu0 %193
    %v196 = vmul.f32 %v185, %v194
    %198 = vrot.lane.b32.xlu0 %v196, 32
    %v199 = vpop.permute.xlu0 %198
    %v201 = vadd.f32 %v191, %v199
    %v202 = vtanh.pop %v201
    %204 = vrot.lane.b32.xlu0 %v202, 64
    %v205 = vpop.permute.xlu0 %204
    %v207 = vmul.f32 %v185, %v205
    %v208 = vstv %s40
    %vm209 = vcmp.gt.s32.totalorder %v37, %v208
    %211 = vrot.lane.b32.xlu0 %v41, 96
    %v212 = vpop.permute.xlu0 %211
    %v214 = vsel %vm209, %v207, %v212
    %v215 = vsel %vm209, %v201, %v189
    %s216 = scalar_lea.vmem %s0, 8
    %v217 = vld [vmem:[%s216] sm:$0xff]
    %218 = vset.pattern.permute.xlu0 0
    %219 = vperm.xlu0 %218, %v217
    %v220 = vpop.permute.xlu0 %219
    %vm221 = vcmp.eq.s32.totalorder %v39, %v220
    %v222 = vsel %vm221, 1, 0
    %v223 = vcvt.s32.f32 %v222
    %v224 = vpack.c.bf16 %v214, %v214
    %226 = vrot.lane.b32.xlu0 %v224, 32
    %v227 = vpop.permute.xlu0 %226
    %v229 = vsel %vm63, %v227, 0
    %231 = vmatprep.subr.bf16.mxu0 0
    %232 = vmatpush1.bf16.msra.mxu0 %v59
    %233 = vmatprep.subr.bf16.mxu0 0
    %234 = vmatpush1.bf16.msra.mxu0 %v60
    %235 = vmatprep.subr.bf16.mxu0 0
    %236 = vmatpush1.bf16.msra.mxu0 0
    %237 = vmatprep.subr.bf16.mxu0 0
    %238 = vmatpush1.bf16.msra.mxu0 0
    %239 = vmatprep.subr.bf16.mxu0 0
    %240 = vmatpush1.bf16.msra.mxu0 0
    %241 = vmatprep.subr.bf16.mxu0 0
    %242 = vmatpush1.bf16.msra.mxu0 0
    %243 = vmatprep.subr.bf16.mxu0 0
    %244 = vmatpush1.bf16.msra.mxu0 0
    %245 = vmatprep.subr.bf16.mxu0 0
    %246 = vmatpush1.bf16.msra.mxu0 0
    %247 = vmatprep.subr.bf16.mxu0 0
    %248 = vmatpush1.bf16.msra.mxu0 0
    %249 = vmatprep.subr.bf16.mxu0 0
    %250 = vmatpush1.bf16.msra.mxu0 0
    %251 = vmatprep.subr.bf16.mxu0 0
    %252 = vmatpush1.bf16.msra.mxu0 0
    %253 = vmatprep.subr.bf16.mxu0 0
    %254 = vmatpush1.bf16.msra.mxu0 0
    %255 = vmatprep.subr.bf16.mxu0 0
    %256 = vmatpush1.bf16.msra.mxu0 0
    %257 = vmatprep.subr.bf16.mxu0 0
    %258 = vmatpush1.bf16.msra.mxu0 0
    %259 = vmatprep.subr.bf16.mxu0 0
    %260 = vmatpush1.bf16.msra.mxu0 0
    %261 = vmatprep.subr.bf16.mxu0 0
    %262 = vmatpush1.bf16.msra.mxu0 0
    %263 = vmatprep.mubr.bf16.mxu0 0
    %264 = vmatmul.mubr.bf16.gmra.mrb[0].mxu0 %v229
    %v265 = vpop.f32.mrb[0].mxu0
    %v266 = vadd.f32 0.0, %v265
    %v267 = vpop.f32.mrb[0].mxu0
    %v268 = vpop.f32.mrb[0].mxu0
    %v269 = vpop.f32.mrb[0].mxu0
    %270 = vdwg.mxu0
    %v272 = vsel %vm63, %v223, 0
    %274 = vmatprep.subr.mxu0 0.0
    %275 = vmatpush1.msra.mxu0 %v26
    %276 = vmatprep.subr.mxu0 0.0
    %277 = vmatpush1.msra.mxu0 %v27
    %278 = vmatprep.subr.mxu0 0.0
    %279 = vmatpush1.msra.mxu0 %v28
    %280 = vmatprep.subr.mxu0 0.0
    %281 = vmatpush1.msra.mxu0 %v29
    %282 = vmatprep.subr.mxu0 0.0
    %283 = vmatpush1.msra.mxu0 0.0
    %284 = vmatprep.subr.mxu0 0.0
    %285 = vmatpush1.msra.mxu0 0.0
    %286 = vmatprep.subr.mxu0 0.0
    %287 = vmatpush1.msra.mxu0 0.0
    %288 = vmatprep.subr.mxu0 0.0
    %289 = vmatpush1.msra.mxu0 0.0
    %290 = vmatprep.subr.mxu0 0.0
    %291 = vmatpush1.msra.mxu0 0.0
    %292 = vmatprep.subr.mxu0 0.0
    %293 = vmatpush1.msra.mxu0 0.0
    %294 = vmatprep.subr.mxu0 0.0
    %295 = vmatpush1.msra.mxu0 0.0
    %296 = vmatprep.subr.mxu0 0.0
    %297 = vmatpush1.msra.mxu0 0.0
    %298 = vmatprep.subr.mxu0 0.0
    %299 = vmatpush1.msra.mxu0 0.0
    %300 = vmatprep.subr.mxu0 0.0
    %301 = vmatpush1.msra.mxu0 0.0
    %302 = vmatprep.subr.mxu0 0.0
    %303 = vmatpush1.msra.mxu0 0.0
    %304 = vmatprep.subr.mxu0 0.0
    %305 = vmatpush1.msra.mxu0 0.0
    %306 = vmatprep.subr.mxu0 0.0
    %307 = vmatpush1.msra.mxu0 0.0
    %308 = vmatprep.subr.mxu0 0.0
    %309 = vmatpush1.msra.mxu0 0.0
    %310 = vmatprep.subr.mxu0 0.0
    %311 = vmatpush1.msra.mxu0 0.0
    %312 = vmatprep.subr.mxu0 0.0
    %313 = vmatpush1.msra.mxu0 0.0
    %314 = vmatprep.subr.mxu0 0.0
    %315 = vmatpush1.msra.mxu0 0.0
    %316 = vmatprep.subr.mxu0 0.0
    %317 = vmatpush1.msra.mxu0 0.0
    %318 = vmatprep.subr.mxu0 0.0
    %319 = vmatpush1.msra.mxu0 0.0
    %320 = vmatprep.subr.mxu0 0.0
    %321 = vmatpush1.msra.mxu0 0.0
    %322 = vmatprep.subr.mxu0 0.0
    %323 = vmatpush1.msra.mxu0 0.0
    %324 = vmatprep.subr.mxu0 0.0
    %325 = vmatpush1.msra.mxu0 0.0
    %326 = vmatprep.subr.mxu0 0.0
    %327 = vmatpush1.msra.mxu0 0.0
    %328 = vmatprep.subr.mxu0 0.0
    %329 = vmatpush1.msra.mxu0 0.0
    %330 = vmatprep.subr.mxu0 0.0
    %331 = vmatpush1.msra.mxu0 0.0
    %332 = vmatprep.subr.mxu0 0.0
    %333 = vmatpush1.msra.mxu0 0.0
    %334 = vmatprep.subr.mxu0 0.0
    %335 = vmatpush1.msra.mxu0 0.0
    %336 = vmatprep.subr.mxu0 0.0
    %337 = vmatpush1.msra.mxu0 0.0
    %338 = vmatprep.mubr.f32.mxu0 0.0
    %339 = vmatmul.mubr.f32.gmra.mrb[0].mxu0 %v272
    %v340 = vpop.f32.mrb[0].mxu0
    %v341 = vadd.f32 %v266, %v340
    %v342 = vpop.f32.mrb[0].mxu0
    %343 = vdwg.mxu0
    %v344 = vxor.u32 %v341, 2147483648
    %v345 = vmul.f32 %v344, 1.442695
    %v346 = vpow.pop %v345
    %v347 = vadd.f32 %v346, 1.0
    %v348 = vrcp.pop %v347
    %v349 = vmul.f32 1.0, %v348
    %v350 = vtanh.pop %v341
    %v351 = vmul.f32 %v349, %v215
    %353 = vrot.lane.b32.xlu0 %v350, 64
    %v354 = vpop.permute.xlu0 %353
    %v356 = vmul.f32 %v349, %v354
    %358 = vrot.lane.b32.xlu0 %v356, 32
    %v359 = vpop.permute.xlu0 %358
    %v361 = vadd.f32 %v351, %v359
    %v362 = vtanh.pop %v361
    %364 = vrot.lane.b32.xlu0 %v362, 64
    %v365 = vpop.permute.xlu0 %364
    %v367 = vmul.f32 %v349, %v365
    %s368 = sadd.s32 %s40, 1
    %v369 = vstv %s368
    %vm370 = vcmp.gt.s32.totalorder %v37, %v369
    %v371 = vsel %vm370, %v367, %v214
    %v372 = vsel %vm370, %v361, %v215
    %s373 = scalar_lea.vmem %s0, 16
    %v374 = vld [vmem:[%s373] sm:$0xff]
    %375 = vset.pattern.permute.xlu0 0
    %376 = vperm.xlu0 %375, %v374
    %v377 = vpop.permute.xlu0 %376
    %vm378 = vcmp.eq.s32.totalorder %v39, %v377
    %v379 = vsel %vm378, 1, 0
    %v380 = vcvt.s32.f32 %v379
    %v381 = vpack.c.bf16 %v371, %v371
    %383 = vrot.lane.b32.xlu0 %v381, 32
    %v384 = vpop.permute.xlu0 %383
    %v386 = vsel %vm63, %v384, 0
    %388 = vmatprep.subr.bf16.mxu0 0
    %389 = vmatpush1.bf16.msra.mxu0 %v59
    %390 = vmatprep.subr.bf16.mxu0 0
    %391 = vmatpush1.bf16.msra.mxu0 %v60
    %392 = vmatprep.subr.bf16.mxu0 0
    %393 = vmatpush1.bf16.msra.mxu0 0
    %394 = vmatprep.subr.bf16.mxu0 0
    %395 = vmatpush1.bf16.msra.mxu0 0
    %396 = vmatprep.subr.bf16.mxu0 0
    %397 = vmatpush1.bf16.msra.mxu0 0
    %398 = vmatprep.subr.bf16.mxu0 0
    %399 = vmatpush1.bf16.msra.mxu0 0
    %400 = vmatprep.subr.bf16.mxu0 0
    %401 = vmatpush1.bf16.msra.mxu0 0
    %402 = vmatprep.subr.bf16.mxu0 0
    %403 = vmatpush1.bf16.msra.mxu0 0
    %404 = vmatprep.subr.bf16.mxu0 0
    %405 = vmatpush1.bf16.msra.mxu0 0
    %406 = vmatprep.subr.bf16.mxu0 0
    %407 = vmatpush1.bf16.msra.mxu0 0
    %408 = vmatprep.subr.bf16.mxu0 0
    %409 = vmatpush1.bf16.msra.mxu0 0
    %410 = vmatprep.subr.bf16.mxu0 0
    %411 = vmatpush1.bf16.msra.mxu0 0
    %412 = vmatprep.subr.bf16.mxu0 0
    %413 = vmatpush1.bf16.msra.mxu0 0
    %414 = vmatprep.subr.bf16.mxu0 0
    %415 = vmatpush1.bf16.msra.mxu0 0
    %416 = vmatprep.subr.bf16.mxu0 0
    %417 = vmatpush1.bf16.msra.mxu0 0
    %418 = vmatprep.subr.bf16.mxu0 0
    %419 = vmatpush1.bf16.msra.mxu0 0
    %420 = vmatprep.mubr.bf16.mxu0 0
    %421 = vmatmul.mubr.bf16.gmra.mrb[0].mxu0 %v386
    %v422 = vpop.f32.mrb[0].mxu0
    %v423 = vadd.f32 0.0, %v422
    %v424 = vpop.f32.mrb[0].mxu0
    %v425 = vpop.f32.mrb[0].mxu0
    %v426 = vpop.f32.mrb[0].mxu0
    %427 = vdwg.mxu0
    %v429 = vsel %vm63, %v380, 0
    %431 = vmatprep.subr.mxu0 0.0
    %432 = vmatpush1.msra.mxu0 %v26
    %433 = vmatprep.subr.mxu0 0.0
    %434 = vmatpush1.msra.mxu0 %v27
    %435 = vmatprep.subr.mxu0 0.0
    %436 = vmatpush1.msra.mxu0 %v28
    %437 = vmatprep.subr.mxu0 0.0
    %438 = vmatpush1.msra.mxu0 %v29
    %439 = vmatprep.subr.mxu0 0.0
    %440 = vmatpush1.msra.mxu0 0.0
    %441 = vmatprep.subr.mxu0 0.0
    %442 = vmatpush1.msra.mxu0 0.0
    %443 = vmatprep.subr.mxu0 0.0
    %444 = vmatpush1.msra.mxu0 0.0
    %445 = vmatprep.subr.mxu0 0.0
    %446 = vmatpush1.msra.mxu0 0.0
    %447 = vmatprep.subr.mxu0 0.0
    %448 = vmatpush1.msra.mxu0 0.0
    %449 = vmatprep.subr.mxu0 0.0
    %450 = vmatpush1.msra.mxu0 0.0
    %451 = vmatprep.subr.mxu0 0.0
    %452 = vmatpush1.msra.mxu0 0.0
    %453 = vmatprep.subr.mxu0 0.0
    %454 = vmatpush1.msra.mxu0 0.0
    %455 = vmatprep.subr.mxu0 0.0
    %456 = vmatpush1.msra.mxu0 0.0
    %457 = vmatprep.subr.mxu0 0.0
    %458 = vmatpush1.msra.mxu0 0.0
    %459 = vmatprep.subr.mxu0 0.0
    %460 = vmatpush1.msra.mxu0 0.0
    %461 = vmatprep.subr.mxu0 0.0
    %462 = vmatpush1.msra.mxu0 0.0
    %463 = vmatprep.subr.mxu0 0.0
    %464 = vmatpush1.msra.mxu0 0.0
    %465 = vmatprep.subr.mxu0 0.0
    %466 = vmatpush1.msra.mxu0 0.0
    %467 = vmatprep.subr.mxu0 0.0
    %468 = vmatpush1.msra.mxu0 0.0
    %469 = vmatprep.subr.mxu0 0.0
    %470 = vmatpush1.msra.mxu0 0.0
    %471 = vmatprep.subr.mxu0 0.0
    %472 = vmatpush1.msra.mxu0 0.0
    %473 = vmatprep.subr.mxu0 0.0
    %474 = vmatpush1.msra.mxu0 0.0
    %475 = vmatprep.subr.mxu0 0.0
    %476 = vmatpush1.msra.mxu0 0.0
    %477 = vmatprep.subr.mxu0 0.0
    %478 = vmatpush1.msra.mxu0 0.0
    %479 = vmatprep.subr.mxu0 0.0
    %480 = vmatpush1.msra.mxu0 0.0
    %481 = vmatprep.subr.mxu0 0.0
    %482 = vmatpush1.msra.mxu0 0.0
    %483 = vmatprep.subr.mxu0 0.0
    %484 = vmatpush1.msra.mxu0 0.0
    %485 = vmatprep.subr.mxu0 0.0
    %486 = vmatpush1.msra.mxu0 0.0
    %487 = vmatprep.subr.mxu0 0.0
    %488 = vmatpush1.msra.mxu0 0.0
    %489 = vmatprep.subr.mxu0 0.0
    %490 = vmatpush1.msra.mxu0 0.0
    %491 = vmatprep.subr.mxu0 0.0
    %492 = vmatpush1.msra.mxu0 0.0
    %493 = vmatprep.subr.mxu0 0.0
    %494 = vmatpush1.msra.mxu0 0.0
    %495 = vmatprep.mubr.f32.mxu0 0.0
    %496 = vmatmul.mubr.f32.gmra.mrb[0].mxu0 %v429
    %v497 = vpop.f32.mrb[0].mxu0
    %v498 = vadd.f32 %v423, %v497
    %v499 = vpop.f32.mrb[0].mxu0
    %500 = vdwg.mxu0
    %v501 = vxor.u32 %v498, 2147483648
    %v502 = vmul.f32 %v501, 1.442695
    %v503 = vpow.pop %v502
    %v504 = vadd.f32 %v503, 1.0
    %v505 = vrcp.pop %v504
    %v506 = vmul.f32 1.0, %v505
    %v507 = vtanh.pop %v498
    %v508 = vmul.f32 %v506, %v372
    %510 = vrot.lane.b32.xlu0 %v507, 64
    %v511 = vpop.permute.xlu0 %510
    %v513 = vmul.f32 %v506, %v511
    %515 = vrot.lane.b32.xlu0 %v513, 32
    %v516 = vpop.permute.xlu0 %515
    %v518 = vadd.f32 %v508, %v516
    %v519 = vtanh.pop %v518
    %521 = vrot.lane.b32.xlu0 %v519, 64
    %v522 = vpop.permute.xlu0 %521
    %v524 = vmul.f32 %v506, %v522
    %s525 = sadd.s32 %s40, 2
    %v526 = vstv %s525
    %vm527 = vcmp.gt.s32.totalorder %v37, %v526
    %v528 = vsel %vm527, %v524, %v371
    %v529 = vsel %vm527, %v518, %v372
    %s530 = scalar_lea.vmem %s0, 24
    %v531 = vld [vmem:[%s530] sm:$0xff]
    %532 = vset.pattern.permute.xlu0 0
    %533 = vperm.xlu0 %532, %v531
    %v534 = vpop.permute.xlu0 %533
    %vm535 = vcmp.eq.s32.totalorder %v39, %v534
    %v536 = vsel %vm535, 1, 0
    %v537 = vcvt.s32.f32 %v536
    %v538 = vpack.c.bf16 %v528, %v528
    %540 = vrot.lane.b32.xlu0 %v538, 32
    %v541 = vpop.permute.xlu0 %540
    %v543 = vsel %vm63, %v541, 0
    %545 = vmatprep.subr.bf16.mxu0 0
    %546 = vmatpush1.bf16.msra.mxu0 %v59
    %547 = vmatprep.subr.bf16.mxu0 0
    %548 = vmatpush1.bf16.msra.mxu0 %v60
    %549 = vmatprep.subr.bf16.mxu0 0
    %550 = vmatpush1.bf16.msra.mxu0 0
    %551 = vmatprep.subr.bf16.mxu0 0
    %552 = vmatpush1.bf16.msra.mxu0 0
    %553 = vmatprep.subr.bf16.mxu0 0
    %554 = vmatpush1.bf16.msra.mxu0 0
    %555 = vmatprep.subr.bf16.mxu0 0
    %556 = vmatpush1.bf16.msra.mxu0 0
    %557 = vmatprep.subr.bf16.mxu0 0
    %558 = vmatpush1.bf16.msra.mxu0 0
    %559 = vmatprep.subr.bf16.mxu0 0
    %560 = vmatpush1.bf16.msra.mxu0 0
    %561 = vmatprep.subr.bf16.mxu0 0
    %562 = vmatpush1.bf16.msra.mxu0 0
    %563 = vmatprep.subr.bf16.mxu0 0
    %564 = vmatpush1.bf16.msra.mxu0 0
    %565 = vmatprep.subr.bf16.mxu0 0
    %566 = vmatpush1.bf16.msra.mxu0 0
    %567 = vmatprep.subr.bf16.mxu0 0
    %568 = vmatpush1.bf16.msra.mxu0 0
    %569 = vmatprep.subr.bf16.mxu0 0
    %570 = vmatpush1.bf16.msra.mxu0 0
    %571 = vmatprep.subr.bf16.mxu0 0
    %572 = vmatpush1.bf16.msra.mxu0 0
    %573 = vmatprep.subr.bf16.mxu0 0
    %574 = vmatpush1.bf16.msra.mxu0 0
    %575 = vmatprep.subr.bf16.mxu0 0
    %576 = vmatpush1.bf16.msra.mxu0 0
    %577 = vmatprep.mubr.bf16.mxu0 0
    %578 = vmatmul.mubr.bf16.gmra.mrb[0].mxu0 %v543
    %v579 = vpop.f32.mrb[0].mxu0
    %v580 = vadd.f32 0.0, %v579
    %v581 = vpop.f32.mrb[0].mxu0
    %v582 = vpop.f32.mrb[0].mxu0
    %v583 = vpop.f32.mrb[0].mxu0
    %584 = vdwg.mxu0
    %v586 = vsel %vm63, %v537, 0
    %588 = vmatprep.subr.mxu0 0.0
    %589 = vmatpush1.msra.mxu0 %v26
    %590 = vmatprep.subr.mxu0 0.0
    %591 = vmatpush1.msra.mxu0 %v27
    %592 = vmatprep.subr.mxu0 0.0
    %593 = vmatpush1.msra.mxu0 %v28
    %594 = vmatprep.subr.mxu0 0.0
    %595 = vmatpush1.msra.mxu0 %v29
    %596 = vmatprep.subr.mxu0 0.0
    %597 = vmatpush1.msra.mxu0 0.0
    %598 = vmatprep.subr.mxu0 0.0
    %599 = vmatpush1.msra.mxu0 0.0
    %600 = vmatprep.subr.mxu0 0.0
    %601 = vmatpush1.msra.mxu0 0.0
    %602 = vmatprep.subr.mxu0 0.0
    %603 = vmatpush1.msra.mxu0 0.0
    %604 = vmatprep.subr.mxu0 0.0
    %605 = vmatpush1.msra.mxu0 0.0
    %606 = vmatprep.subr.mxu0 0.0
    %607 = vmatpush1.msra.mxu0 0.0
    %608 = vmatprep.subr.mxu0 0.0
    %609 = vmatpush1.msra.mxu0 0.0
    %610 = vmatprep.subr.mxu0 0.0
    %611 = vmatpush1.msra.mxu0 0.0
    %612 = vmatprep.subr.mxu0 0.0
    %613 = vmatpush1.msra.mxu0 0.0
    %614 = vmatprep.subr.mxu0 0.0
    %615 = vmatpush1.msra.mxu0 0.0
    %616 = vmatprep.subr.mxu0 0.0
    %617 = vmatpush1.msra.mxu0 0.0
    %618 = vmatprep.subr.mxu0 0.0
    %619 = vmatpush1.msra.mxu0 0.0
    %620 = vmatprep.subr.mxu0 0.0
    %621 = vmatpush1.msra.mxu0 0.0
    %622 = vmatprep.subr.mxu0 0.0
    %623 = vmatpush1.msra.mxu0 0.0
    %624 = vmatprep.subr.mxu0 0.0
    %625 = vmatpush1.msra.mxu0 0.0
    %626 = vmatprep.subr.mxu0 0.0
    %627 = vmatpush1.msra.mxu0 0.0
    %628 = vmatprep.subr.mxu0 0.0
    %629 = vmatpush1.msra.mxu0 0.0
    %630 = vmatprep.subr.mxu0 0.0
    %631 = vmatpush1.msra.mxu0 0.0
    %632 = vmatprep.subr.mxu0 0.0
    %633 = vmatpush1.msra.mxu0 0.0
    %634 = vmatprep.subr.mxu0 0.0
    %635 = vmatpush1.msra.mxu0 0.0
    %636 = vmatprep.subr.mxu0 0.0
    %637 = vmatpush1.msra.mxu0 0.0
    %638 = vmatprep.subr.mxu0 0.0
    %639 = vmatpush1.msra.mxu0 0.0
    %640 = vmatprep.subr.mxu0 0.0
    %641 = vmatpush1.msra.mxu0 0.0
    %642 = vmatprep.subr.mxu0 0.0
    %643 = vmatpush1.msra.mxu0 0.0
    %644 = vmatprep.subr.mxu0 0.0
    %645 = vmatpush1.msra.mxu0 0.0
    %646 = vmatprep.subr.mxu0 0.0
    %647 = vmatpush1.msra.mxu0 0.0
    %648 = vmatprep.subr.mxu0 0.0
    %649 = vmatpush1.msra.mxu0 0.0
    %650 = vmatprep.subr.mxu0 0.0
    %651 = vmatpush1.msra.mxu0 0.0
    %652 = vmatprep.mubr.f32.mxu0 0.0
    %653 = vmatmul.mubr.f32.gmra.mrb[0].mxu0 %v586
    %v654 = vpop.f32.mrb[0].mxu0
    %v655 = vadd.f32 %v580, %v654
    %v656 = vpop.f32.mrb[0].mxu0
    %657 = vdwg.mxu0
    %v658 = vxor.u32 %v655, 2147483648
    %v659 = vmul.f32 %v658, 1.442695
    %v660 = vpow.pop %v659
    %v661 = vadd.f32 %v660, 1.0
    %v662 = vrcp.pop %v661
    %v663 = vmul.f32 1.0, %v662
    %v664 = vtanh.pop %v655
    %v665 = vmul.f32 %v663, %v529
    %667 = vrot.lane.b32.xlu0 %v664, 64
    %v668 = vpop.permute.xlu0 %667
    %v670 = vmul.f32 %v663, %v668
    %672 = vrot.lane.b32.xlu0 %v670, 32
    %v673 = vpop.permute.xlu0 %672
    %v675 = vadd.f32 %v665, %v673
    %v676 = vtanh.pop %v675
    %678 = vrot.lane.b32.xlu0 %v676, 64
    %v679 = vpop.permute.xlu0 %678
    %v681 = vmul.f32 %v663, %v679
    %s682 = sadd.s32 %s40, 3
    %v683 = vstv %s682
    %vm684 = vcmp.gt.s32.totalorder %v37, %v683
    %v685 = vsel %vm684, %v681, %v528
    %v686 = vsel %vm684, %v675, %v529
    %s687 = scalar_lea.vmem %s0, 32
    %v688 = vld [vmem:[%s687] sm:$0xff]
    %689 = vset.pattern.permute.xlu0 0
    %690 = vperm.xlu0 %689, %v688
    %v691 = vpop.permute.xlu0 %690
    %vm692 = vcmp.eq.s32.totalorder %v39, %v691
    %v693 = vsel %vm692, 1, 0
    %v694 = vcvt.s32.f32 %v693
    %v695 = vpack.c.bf16 %v685, %v685
    %697 = vrot.lane.b32.xlu0 %v695, 32
    %v698 = vpop.permute.xlu0 %697
    %v700 = vsel %vm63, %v698, 0
    %702 = vmatprep.subr.bf16.mxu0 0
    %703 = vmatpush1.bf16.msra.mxu0 %v59
    %704 = vmatprep.subr.bf16.mxu0 0
    %705 = vmatpush1.bf16.msra.mxu0 %v60
    %706 = vmatprep.subr.bf16.mxu0 0
    %707 = vmatpush1.bf16.msra.mxu0 0
    %708 = vmatprep.subr.bf16.mxu0 0
    %709 = vmatpush1.bf16.msra.mxu0 0
    %710 = vmatprep.subr.bf16.mxu0 0
    %711 = vmatpush1.bf16.msra.mxu0 0
    %712 = vmatprep.subr.bf16.mxu0 0
    %713 = vmatpush1.bf16.msra.mxu0 0
    %714 = vmatprep.subr.bf16.mxu0 0
    %715 = vmatpush1.bf16.msra.mxu0 0
    %716 = vmatprep.subr.bf16.mxu0 0
    %717 = vmatpush1.bf16.msra.mxu0 0
    %718 = vmatprep.subr.bf16.mxu0 0
    %719 = vmatpush1.bf16.msra.mxu0 0
    %720 = vmatprep.subr.bf16.mxu0 0
    %721 = vmatpush1.bf16.msra.mxu0 0
    %722 = vmatprep.subr.bf16.mxu0 0
    %723 = vmatpush1.bf16.msra.mxu0 0
    %724 = vmatprep.subr.bf16.mxu0 0
    %725 = vmatpush1.bf16.msra.mxu0 0
    %726 = vmatprep.subr.bf16.mxu0 0
    %727 = vmatpush1.bf16.msra.mxu0 0
    %728 = vmatprep.subr.bf16.mxu0 0
    %729 = vmatpush1.bf16.msra.mxu0 0
    %730 = vmatprep.subr.bf16.mxu0 0
    %731 = vmatpush1.bf16.msra.mxu0 0
    %732 = vmatprep.subr.bf16.mxu0 0
    %733 = vmatpush1.bf16.msra.mxu0 0
    %734 = vmatprep.mubr.bf16.mxu0 0
    %735 = vmatmul.mubr.bf16.gmra.mrb[0].mxu0 %v700
    %v736 = vpop.f32.mrb[0].mxu0
    %v737 = vadd.f32 0.0, %v736
    %v738 = vpop.f32.mrb[0].mxu0
    %v739 = vpop.f32.mrb[0].mxu0
    %v740 = vpop.f32.mrb[0].mxu0
    %741 = vdwg.mxu0
    %v743 = vsel %vm63, %v694, 0
    %745 = vmatprep.subr.mxu0 0.0
    %746 = vmatpush1.msra.mxu0 %v26
    %747 = vmatprep.subr.mxu0 0.0
    %748 = vmatpush1.msra.mxu0 %v27
    %749 = vmatprep.subr.mxu0 0.0
    %750 = vmatpush1.msra.mxu0 %v28
    %751 = vmatprep.subr.mxu0 0.0
    %752 = vmatpush1.msra.mxu0 %v29
    %753 = vmatprep.subr.mxu0 0.0
    %754 = vmatpush1.msra.mxu0 0.0
    %755 = vmatprep.subr.mxu0 0.0
    %756 = vmatpush1.msra.mxu0 0.0
    %757 = vmatprep.subr.mxu0 0.0
    %758 = vmatpush1.msra.mxu0 0.0
    %759 = vmatprep.subr.mxu0 0.0
    %760 = vmatpush1.msra.mxu0 0.0
    %761 = vmatprep.subr.mxu0 0.0
    %762 = vmatpush1.msra.mxu0 0.0
    %763 = vmatprep.subr.mxu0 0.0
    %764 = vmatpush1.msra.mxu0 0.0
    %765 = vmatprep.subr.mxu0 0.0
    %766 = vmatpush1.msra.mxu0 0.0
    %767 = vmatprep.subr.mxu0 0.0
    %768 = vmatpush1.msra.mxu0 0.0
    %769 = vmatprep.subr.mxu0 0.0
    %770 = vmatpush1.msra.mxu0 0.0
    %771 = vmatprep.subr.mxu0 0.0
    %772 = vmatpush1.msra.mxu0 0.0
    %773 = vmatprep.subr.mxu0 0.0
    %774 = vmatpush1.msra.mxu0 0.0
    %775 = vmatprep.subr.mxu0 0.0
    %776 = vmatpush1.msra.mxu0 0.0
    %777 = vmatprep.subr.mxu0 0.0
    %778 = vmatpush1.msra.mxu0 0.0
    %779 = vmatprep.subr.mxu0 0.0
    %780 = vmatpush1.msra.mxu0 0.0
    %781 = vmatprep.subr.mxu0 0.0
    %782 = vmatpush1.msra.mxu0 0.0
    %783 = vmatprep.subr.mxu0 0.0
    %784 = vmatpush1.msra.mxu0 0.0
    %785 = vmatprep.subr.mxu0 0.0
    %786 = vmatpush1.msra.mxu0 0.0
    %787 = vmatprep.subr.mxu0 0.0
    %788 = vmatpush1.msra.mxu0 0.0
    %789 = vmatprep.subr.mxu0 0.0
    %790 = vmatpush1.msra.mxu0 0.0
    %791 = vmatprep.subr.mxu0 0.0
    %792 = vmatpush1.msra.mxu0 0.0
    %793 = vmatprep.subr.mxu0 0.0
    %794 = vmatpush1.msra.mxu0 0.0
    %795 = vmatprep.subr.mxu0 0.0
    %796 = vmatpush1.msra.mxu0 0.0
    %797 = vmatprep.subr.mxu0 0.0
    %798 = vmatpush1.msra.mxu0 0.0
    %799 = vmatprep.subr.mxu0 0.0
    %800 = vmatpush1.msra.mxu0 0.0
    %801 = vmatprep.subr.mxu0 0.0
    %802 = vmatpush1.msra.mxu0 0.0
    %803 = vmatprep.subr.mxu0 0.0
    %804 = vmatpush1.msra.mxu0 0.0
    %805 = vmatprep.subr.mxu0 0.0
    %806 = vmatpush1.msra.mxu0 0.0
    %807 = vmatprep.subr.mxu0 0.0
    %808 = vmatpush1.msra.mxu0 0.0
    %809 = vmatprep.mubr.f32.mxu0 0.0
    %810 = vmatmul.mubr.f32.gmra.mrb[0].mxu0 %v743
    %v811 = vpop.f32.mrb[0].mxu0
    %v812 = vadd.f32 %v737, %v811
    %v813 = vpop.f32.mrb[0].mxu0
    %814 = vdwg.mxu0
    %v815 = vxor.u32 %v812, 2147483648
    %v816 = vmul.f32 %v815, 1.442695
    %v817 = vpow.pop %v816
    %v818 = vadd.f32 %v817, 1.0
    %v819 = vrcp.pop %v818
    %v820 = vmul.f32 1.0, %v819
    %v821 = vtanh.pop %v812
    %v822 = vmul.f32 %v820, %v686
    %824 = vrot.lane.b32.xlu0 %v821, 64
    %v825 = vpop.permute.xlu0 %824
    %v827 = vmul.f32 %v820, %v825
    %829 = vrot.lane.b32.xlu0 %v827, 32
    %v830 = vpop.permute.xlu0 %829
    %v832 = vadd.f32 %v822, %v830
    %v833 = vtanh.pop %v832
    %835 = vrot.lane.b32.xlu0 %v833, 64
    %v836 = vpop.permute.xlu0 %835
    %v838 = vmul.f32 %v820, %v836
    %s839 = sadd.s32 %s40, 4
    %v840 = vstv %s839
    %vm841 = vcmp.gt.s32.totalorder %v37, %v840
    %v842 = vsel %vm841, %v838, %v685
    %v843 = vsel %vm841, %v832, %v686
    %s844 = scalar_lea.vmem %s0, 40
    %v845 = vld [vmem:[%s844] sm:$0xff]
    %846 = vset.pattern.permute.xlu0 0
    %847 = vperm.xlu0 %846, %v845
    %v848 = vpop.permute.xlu0 %847
    %vm849 = vcmp.eq.s32.totalorder %v39, %v848
    %v850 = vsel %vm849, 1, 0
    %v851 = vcvt.s32.f32 %v850
    %v852 = vpack.c.bf16 %v842, %v842
    %854 = vrot.lane.b32.xlu0 %v852, 32
    %v855 = vpop.permute.xlu0 %854
    %v857 = vsel %vm63, %v855, 0
    %859 = vmatprep.subr.bf16.mxu0 0
    %860 = vmatpush1.bf16.msra.mxu0 %v59
    %861 = vmatprep.subr.bf16.mxu0 0
    %862 = vmatpush1.bf16.msra.mxu0 %v60
    %863 = vmatprep.subr.bf16.mxu0 0
    %864 = vmatpush1.bf16.msra.mxu0 0
    %865 = vmatprep.subr.bf16.mxu0 0
    %866 = vmatpush1.bf16.msra.mxu0 0
    %867 = vmatprep.subr.bf16.mxu0 0
    %868 = vmatpush1.bf16.msra.mxu0 0
    %869 = vmatprep.subr.bf16.mxu0 0
    %870 = vmatpush1.bf16.msra.mxu0 0
    %871 = vmatprep.subr.bf16.mxu0 0
    %872 = vmatpush1.bf16.msra.mxu0 0
    %873 = vmatprep.subr.bf16.mxu0 0
    %874 = vmatpush1.bf16.msra.mxu0 0
    %875 = vmatprep.subr.bf16.mxu0 0
    %876 = vmatpush1.bf16.msra.mxu0 0
    %877 = vmatprep.subr.bf16.mxu0 0
    %878 = vmatpush1.bf16.msra.mxu0 0
    %879 = vmatprep.subr.bf16.mxu0 0
    %880 = vmatpush1.bf16.msra.mxu0 0
    %881 = vmatprep.subr.bf16.mxu0 0
    %882 = vmatpush1.bf16.msra.mxu0 0
    %883 = vmatprep.subr.bf16.mxu0 0
    %884 = vmatpush1.bf16.msra.mxu0 0
    %885 = vmatprep.subr.bf16.mxu0 0
    %886 = vmatpush1.bf16.msra.mxu0 0
    %887 = vmatprep.subr.bf16.mxu0 0
    %888 = vmatpush1.bf16.msra.mxu0 0
    %889 = vmatprep.subr.bf16.mxu0 0
    %890 = vmatpush1.bf16.msra.mxu0 0
    %891 = vmatprep.mubr.bf16.mxu0 0
    %892 = vmatmul.mubr.bf16.gmra.mrb[0].mxu0 %v857
    %v893 = vpop.f32.mrb[0].mxu0
    %v894 = vadd.f32 0.0, %v893
    %v895 = vpop.f32.mrb[0].mxu0
    %v896 = vpop.f32.mrb[0].mxu0
    %v897 = vpop.f32.mrb[0].mxu0
    %898 = vdwg.mxu0
    %v900 = vsel %vm63, %v851, 0
    %902 = vmatprep.subr.mxu0 0.0
    %903 = vmatpush1.msra.mxu0 %v26
    %904 = vmatprep.subr.mxu0 0.0
    %905 = vmatpush1.msra.mxu0 %v27
    %906 = vmatprep.subr.mxu0 0.0
    %907 = vmatpush1.msra.mxu0 %v28
    %908 = vmatprep.subr.mxu0 0.0
    %909 = vmatpush1.msra.mxu0 %v29
    %910 = vmatprep.subr.mxu0 0.0
    %911 = vmatpush1.msra.mxu0 0.0
    %912 = vmatprep.subr.mxu0 0.0
    %913 = vmatpush1.msra.mxu0 0.0
    %914 = vmatprep.subr.mxu0 0.0
    %915 = vmatpush1.msra.mxu0 0.0
    %916 = vmatprep.subr.mxu0 0.0
    %917 = vmatpush1.msra.mxu0 0.0
    %918 = vmatprep.subr.mxu0 0.0
    %919 = vmatpush1.msra.mxu0 0.0
    %920 = vmatprep.subr.mxu0 0.0
    %921 = vmatpush1.msra.mxu0 0.0
    %922 = vmatprep.subr.mxu0 0.0
    %923 = vmatpush1.msra.mxu0 0.0
    %924 = vmatprep.subr.mxu0 0.0
    %925 = vmatpush1.msra.mxu0 0.0
    %926 = vmatprep.subr.mxu0 0.0
    %927 = vmatpush1.msra.mxu0 0.0
    %928 = vmatprep.subr.mxu0 0.0
    %929 = vmatpush1.msra.mxu0 0.0
    %930 = vmatprep.subr.mxu0 0.0
    %931 = vmatpush1.msra.mxu0 0.0
    %932 = vmatprep.subr.mxu0 0.0
    %933 = vmatpush1.msra.mxu0 0.0
    %934 = vmatprep.subr.mxu0 0.0
    %935 = vmatpush1.msra.mxu0 0.0
    %936 = vmatprep.subr.mxu0 0.0
    %937 = vmatpush1.msra.mxu0 0.0
    %938 = vmatprep.subr.mxu0 0.0
    %939 = vmatpush1.msra.mxu0 0.0
    %940 = vmatprep.subr.mxu0 0.0
    %941 = vmatpush1.msra.mxu0 0.0
    %942 = vmatprep.subr.mxu0 0.0
    %943 = vmatpush1.msra.mxu0 0.0
    %944 = vmatprep.subr.mxu0 0.0
    %945 = vmatpush1.msra.mxu0 0.0
    %946 = vmatprep.subr.mxu0 0.0
    %947 = vmatpush1.msra.mxu0 0.0
    %948 = vmatprep.subr.mxu0 0.0
    %949 = vmatpush1.msra.mxu0 0.0
    %950 = vmatprep.subr.mxu0 0.0
    %951 = vmatpush1.msra.mxu0 0.0
    %952 = vmatprep.subr.mxu0 0.0
    %953 = vmatpush1.msra.mxu0 0.0
    %954 = vmatprep.subr.mxu0 0.0
    %955 = vmatpush1.msra.mxu0 0.0
    %956 = vmatprep.subr.mxu0 0.0
    %957 = vmatpush1.msra.mxu0 0.0
    %958 = vmatprep.subr.mxu0 0.0
    %959 = vmatpush1.msra.mxu0 0.0
    %960 = vmatprep.subr.mxu0 0.0
    %961 = vmatpush1.msra.mxu0 0.0
    %962 = vmatprep.subr.mxu0 0.0
    %963 = vmatpush1.msra.mxu0 0.0
    %964 = vmatprep.subr.mxu0 0.0
    %965 = vmatpush1.msra.mxu0 0.0
    %966 = vmatprep.mubr.f32.mxu0 0.0
    %967 = vmatmul.mubr.f32.gmra.mrb[0].mxu0 %v900
    %v968 = vpop.f32.mrb[0].mxu0
    %v969 = vadd.f32 %v894, %v968
    %v970 = vpop.f32.mrb[0].mxu0
    %971 = vdwg.mxu0
    %v972 = vxor.u32 %v969, 2147483648
    %v973 = vmul.f32 %v972, 1.442695
    %v974 = vpow.pop %v973
    %v975 = vadd.f32 %v974, 1.0
    %v976 = vrcp.pop %v975
    %v977 = vmul.f32 1.0, %v976
    %v978 = vtanh.pop %v969
    %v979 = vmul.f32 %v977, %v843
    %981 = vrot.lane.b32.xlu0 %v978, 64
    %v982 = vpop.permute.xlu0 %981
    %v984 = vmul.f32 %v977, %v982
    %986 = vrot.lane.b32.xlu0 %v984, 32
    %v987 = vpop.permute.xlu0 %986
    %v989 = vadd.f32 %v979, %v987
    %v990 = vtanh.pop %v989
    %992 = vrot.lane.b32.xlu0 %v990, 64
    %v993 = vpop.permute.xlu0 %992
    %v995 = vmul.f32 %v977, %v993
    %s996 = sadd.s32 %s40, 5
    %v997 = vstv %s996
    %vm998 = vcmp.gt.s32.totalorder %v37, %v997
    %v999 = vsel %vm998, %v995, %v842
    %v1000 = vsel %vm998, %v989, %v843
    %s1001 = scalar_lea.vmem %s0, 48
    %v1002 = vld [vmem:[%s1001] sm:$0xff]
    %1003 = vset.pattern.permute.xlu0 0
    %1004 = vperm.xlu0 %1003, %v1002
    %v1005 = vpop.permute.xlu0 %1004
    %vm1006 = vcmp.eq.s32.totalorder %v39, %v1005
    %v1007 = vsel %vm1006, 1, 0
    %v1008 = vcvt.s32.f32 %v1007
    %v1009 = vpack.c.bf16 %v999, %v999
    %1011 = vrot.lane.b32.xlu0 %v1009, 32
    %v1012 = vpop.permute.xlu0 %1011
    %v1014 = vsel %vm63, %v1012, 0
    %1016 = vmatprep.subr.bf16.mxu0 0
    %1017 = vmatpush1.bf16.msra.mxu0 %v59
    %1018 = vmatprep.subr.bf16.mxu0 0
    %1019 = vmatpush1.bf16.msra.mxu0 %v60
    %1020 = vmatprep.subr.bf16.mxu0 0
    %1021 = vmatpush1.bf16.msra.mxu0 0
    %1022 = vmatprep.subr.bf16.mxu0 0
    %1023 = vmatpush1.bf16.msra.mxu0 0
    %1024 = vmatprep.subr.bf16.mxu0 0
    %1025 = vmatpush1.bf16.msra.mxu0 0
    %1026 = vmatprep.subr.bf16.mxu0 0
    %1027 = vmatpush1.bf16.msra.mxu0 0
    %1028 = vmatprep.subr.bf16.mxu0 0
    %1029 = vmatpush1.bf16.msra.mxu0 0
    %1030 = vmatprep.subr.bf16.mxu0 0
    %1031 = vmatpush1.bf16.msra.mxu0 0
    %1032 = vmatprep.subr.bf16.mxu0 0
    %1033 = vmatpush1.bf16.msra.mxu0 0
    %1034 = vmatprep.subr.bf16.mxu0 0
    %1035 = vmatpush1.bf16.msra.mxu0 0
    %1036 = vmatprep.subr.bf16.mxu0 0
    %1037 = vmatpush1.bf16.msra.mxu0 0
    %1038 = vmatprep.subr.bf16.mxu0 0
    %1039 = vmatpush1.bf16.msra.mxu0 0
    %1040 = vmatprep.subr.bf16.mxu0 0
    %1041 = vmatpush1.bf16.msra.mxu0 0
    %1042 = vmatprep.subr.bf16.mxu0 0
    %1043 = vmatpush1.bf16.msra.mxu0 0
    %1044 = vmatprep.subr.bf16.mxu0 0
    %1045 = vmatpush1.bf16.msra.mxu0 0
    %1046 = vmatprep.subr.bf16.mxu0 0
    %1047 = vmatpush1.bf16.msra.mxu0 0
    %1048 = vmatprep.mubr.bf16.mxu0 0
    %1049 = vmatmul.mubr.bf16.gmra.mrb[0].mxu0 %v1014
    %v1050 = vpop.f32.mrb[0].mxu0
    %v1051 = vadd.f32 0.0, %v1050
    %v1052 = vpop.f32.mrb[0].mxu0
    %v1053 = vpop.f32.mrb[0].mxu0
    %v1054 = vpop.f32.mrb[0].mxu0
    %1055 = vdwg.mxu0
    %v1057 = vsel %vm63, %v1008, 0
    %1059 = vmatprep.subr.mxu0 0.0
    %1060 = vmatpush1.msra.mxu0 %v26
    %1061 = vmatprep.subr.mxu0 0.0
    %1062 = vmatpush1.msra.mxu0 %v27
    %1063 = vmatprep.subr.mxu0 0.0
    %1064 = vmatpush1.msra.mxu0 %v28
    %1065 = vmatprep.subr.mxu0 0.0
    %1066 = vmatpush1.msra.mxu0 %v29
    %1067 = vmatprep.subr.mxu0 0.0
    %1068 = vmatpush1.msra.mxu0 0.0
    %1069 = vmatprep.subr.mxu0 0.0
    %1070 = vmatpush1.msra.mxu0 0.0
    %1071 = vmatprep.subr.mxu0 0.0
    %1072 = vmatpush1.msra.mxu0 0.0
    %1073 = vmatprep.subr.mxu0 0.0
    %1074 = vmatpush1.msra.mxu0 0.0
    %1075 = vmatprep.subr.mxu0 0.0
    %1076 = vmatpush1.msra.mxu0 0.0
    %1077 = vmatprep.subr.mxu0 0.0
    %1078 = vmatpush1.msra.mxu0 0.0
    %1079 = vmatprep.subr.mxu0 0.0
    %1080 = vmatpush1.msra.mxu0 0.0
    %1081 = vmatprep.subr.mxu0 0.0
    %1082 = vmatpush1.msra.mxu0 0.0
    %1083 = vmatprep.subr.mxu0 0.0
    %1084 = vmatpush1.msra.mxu0 0.0
    %1085 = vmatprep.subr.mxu0 0.0
    %1086 = vmatpush1.msra.mxu0 0.0
    %1087 = vmatprep.subr.mxu0 0.0
    %1088 = vmatpush1.msra.mxu0 0.0
    %1089 = vmatprep.subr.mxu0 0.0
    %1090 = vmatpush1.msra.mxu0 0.0
    %1091 = vmatprep.subr.mxu0 0.0
    %1092 = vmatpush1.msra.mxu0 0.0
    %1093 = vmatprep.subr.mxu0 0.0
    %1094 = vmatpush1.msra.mxu0 0.0
    %1095 = vmatprep.subr.mxu0 0.0
    %1096 = vmatpush1.msra.mxu0 0.0
    %1097 = vmatprep.subr.mxu0 0.0
    %1098 = vmatpush1.msra.mxu0 0.0
    %1099 = vmatprep.subr.mxu0 0.0
    %1100 = vmatpush1.msra.mxu0 0.0
    %1101 = vmatprep.subr.mxu0 0.0
    %1102 = vmatpush1.msra.mxu0 0.0
    %1103 = vmatprep.subr.mxu0 0.0
    %1104 = vmatpush1.msra.mxu0 0.0
    %1105 = vmatprep.subr.mxu0 0.0
    %1106 = vmatpush1.msra.mxu0 0.0
    %1107 = vmatprep.subr.mxu0 0.0
    %1108 = vmatpush1.msra.mxu0 0.0
    %1109 = vmatprep.subr.mxu0 0.0
    %1110 = vmatpush1.msra.mxu0 0.0
    %1111 = vmatprep.subr.mxu0 0.0
    %1112 = vmatpush1.msra.mxu0 0.0
    %1113 = vmatprep.subr.mxu0 0.0
    %1114 = vmatpush1.msra.mxu0 0.0
    %1115 = vmatprep.subr.mxu0 0.0
    %1116 = vmatpush1.msra.mxu0 0.0
    %1117 = vmatprep.subr.mxu0 0.0
    %1118 = vmatpush1.msra.mxu0 0.0
    %1119 = vmatprep.subr.mxu0 0.0
    %1120 = vmatpush1.msra.mxu0 0.0
    %1121 = vmatprep.subr.mxu0 0.0
    %1122 = vmatpush1.msra.mxu0 0.0
    %1123 = vmatprep.mubr.f32.mxu0 0.0
    %1124 = vmatmul.mubr.f32.gmra.mrb[0].mxu0 %v1057
    %v1125 = vpop.f32.mrb[0].mxu0
    %v1126 = vadd.f32 %v1051, %v1125
    %v1127 = vpop.f32.mrb[0].mxu0
    %1128 = vdwg.mxu0
    %v1129 = vxor.u32 %v1126, 2147483648
    %v1130 = vmul.f32 %v1129, 1.442695
    %v1131 = vpow.pop %v1130
    %v1132 = vadd.f32 %v1131, 1.0
    %v1133 = vrcp.pop %v1132
    %v1134 = vmul.f32 1.0, %v1133
    %v1135 = vtanh.pop %v1126
    %v1136 = vmul.f32 %v1134, %v1000
    %1138 = vrot.lane.b32.xlu0 %v1135, 64
    %v1139 = vpop.permute.xlu0 %1138
    %v1141 = vmul.f32 %v1134, %v1139
    %1143 = vrot.lane.b32.xlu0 %v1141, 32
    %v1144 = vpop.permute.xlu0 %1143
    %v1146 = vadd.f32 %v1136, %v1144
    %v1147 = vtanh.pop %v1146
    %1149 = vrot.lane.b32.xlu0 %v1147, 64
    %v1150 = vpop.permute.xlu0 %1149
    %v1152 = vmul.f32 %v1134, %v1150
    %s1153 = sadd.s32 %s40, 6
    %v1154 = vstv %s1153
    %vm1155 = vcmp.gt.s32.totalorder %v37, %v1154
    %v1156 = vsel %vm1155, %v1152, %v999
    %v1157 = vsel %vm1155, %v1146, %v1000
    %s1158 = scalar_lea.vmem %s0, 56
    %v1159 = vld [vmem:[%s1158] sm:$0xff]
    %1160 = vset.pattern.permute.xlu0 0
    %1161 = vperm.xlu0 %1160, %v1159
    %v1162 = vpop.permute.xlu0 %1161
    %vm1163 = vcmp.eq.s32.totalorder %v39, %v1162
    %v1164 = vsel %vm1163, 1, 0
    %v1165 = vcvt.s32.f32 %v1164
    %v1166 = vpack.c.bf16 %v1156, %v1156
    %1168 = vrot.lane.b32.xlu0 %v1166, 32
    %v1169 = vpop.permute.xlu0 %1168
    %v1171 = vsel %vm63, %v1169, 0
    %1173 = vmatprep.subr.bf16.mxu0 0
    %1174 = vmatpush1.bf16.msra.mxu0 %v59
    %1175 = vmatprep.subr.bf16.mxu0 0
    %1176 = vmatpush1.bf16.msra.mxu0 %v60
    %1177 = vmatprep.subr.bf16.mxu0 0
    %1178 = vmatpush1.bf16.msra.mxu0 0
    %1179 = vmatprep.subr.bf16.mxu0 0
    %1180 = vmatpush1.bf16.msra.mxu0 0
    %1181 = vmatprep.subr.bf16.mxu0 0
    %1182 = vmatpush1.bf16.msra.mxu0 0
    %1183 = vmatprep.subr.bf16.mxu0 0
    %1184 = vmatpush1.bf16.msra.mxu0 0
    %1185 = vmatprep.subr.bf16.mxu0 0
    %1186 = vmatpush1.bf16.msra.mxu0 0
    %1187 = vmatprep.subr.bf16.mxu0 0
    %1188 = vmatpush1.bf16.msra.mxu0 0
    %1189 = vmatprep.subr.bf16.mxu0 0
    %1190 = vmatpush1.bf16.msra.mxu0 0
    %1191 = vmatprep.subr.bf16.mxu0 0
    %1192 = vmatpush1.bf16.msra.mxu0 0
    %1193 = vmatprep.subr.bf16.mxu0 0
    %1194 = vmatpush1.bf16.msra.mxu0 0
    %1195 = vmatprep.subr.bf16.mxu0 0
    %1196 = vmatpush1.bf16.msra.mxu0 0
    %1197 = vmatprep.subr.bf16.mxu0 0
    %1198 = vmatpush1.bf16.msra.mxu0 0
    %1199 = vmatprep.subr.bf16.mxu0 0
    %1200 = vmatpush1.bf16.msra.mxu0 0
    %1201 = vmatprep.subr.bf16.mxu0 0
    %1202 = vmatpush1.bf16.msra.mxu0 0
    %1203 = vmatprep.subr.bf16.mxu0 0
    %1204 = vmatpush1.bf16.msra.mxu0 0
    %1205 = vmatprep.mubr.bf16.mxu0 0
    %1206 = vmatmul.mubr.bf16.gmra.mrb[0].mxu0 %v1171
    %v1207 = vpop.f32.mrb[0].mxu0
    %v1208 = vadd.f32 0.0, %v1207
    %v1209 = vpop.f32.mrb[0].mxu0
    %v1210 = vpop.f32.mrb[0].mxu0
    %v1211 = vpop.f32.mrb[0].mxu0
    %1212 = vdwg.mxu0
    %v1214 = vsel %vm63, %v1165, 0
    %1216 = vmatprep.subr.mxu0 0.0
    %1217 = vmatpush1.msra.mxu0 %v26
    %1218 = vmatprep.subr.mxu0 0.0
    %1219 = vmatpush1.msra.mxu0 %v27
    %1220 = vmatprep.subr.mxu0 0.0
    %1221 = vmatpush1.msra.mxu0 %v28
    %1222 = vmatprep.subr.mxu0 0.0
    %1223 = vmatpush1.msra.mxu0 %v29
    %1224 = vmatprep.subr.mxu0 0.0
    %1225 = vmatpush1.msra.mxu0 0.0
    %1226 = vmatprep.subr.mxu0 0.0
    %1227 = vmatpush1.msra.mxu0 0.0
    %1228 = vmatprep.subr.mxu0 0.0
    %1229 = vmatpush1.msra.mxu0 0.0
    %1230 = vmatprep.subr.mxu0 0.0
    %1231 = vmatpush1.msra.mxu0 0.0
    %1232 = vmatprep.subr.mxu0 0.0
    %1233 = vmatpush1.msra.mxu0 0.0
    %1234 = vmatprep.subr.mxu0 0.0
    %1235 = vmatpush1.msra.mxu0 0.0
    %1236 = vmatprep.subr.mxu0 0.0
    %1237 = vmatpush1.msra.mxu0 0.0
    %1238 = vmatprep.subr.mxu0 0.0
    %1239 = vmatpush1.msra.mxu0 0.0
    %1240 = vmatprep.subr.mxu0 0.0
    %1241 = vmatpush1.msra.mxu0 0.0
    %1242 = vmatprep.subr.mxu0 0.0
    %1243 = vmatpush1.msra.mxu0 0.0
    %1244 = vmatprep.subr.mxu0 0.0
    %1245 = vmatpush1.msra.mxu0 0.0
    %1246 = vmatprep.subr.mxu0 0.0
    %1247 = vmatpush1.msra.mxu0 0.0
    %1248 = vmatprep.subr.mxu0 0.0
    %1249 = vmatpush1.msra.mxu0 0.0
    %1250 = vmatprep.subr.mxu0 0.0
    %1251 = vmatpush1.msra.mxu0 0.0
    %1252 = vmatprep.subr.mxu0 0.0
    %1253 = vmatpush1.msra.mxu0 0.0
    %1254 = vmatprep.subr.mxu0 0.0
    %1255 = vmatpush1.msra.mxu0 0.0
    %1256 = vmatprep.subr.mxu0 0.0
    %1257 = vmatpush1.msra.mxu0 0.0
    %1258 = vmatprep.subr.mxu0 0.0
    %1259 = vmatpush1.msra.mxu0 0.0
    %1260 = vmatprep.subr.mxu0 0.0
    %1261 = vmatpush1.msra.mxu0 0.0
    %1262 = vmatprep.subr.mxu0 0.0
    %1263 = vmatpush1.msra.mxu0 0.0
    %1264 = vmatprep.subr.mxu0 0.0
    %1265 = vmatpush1.msra.mxu0 0.0
    %1266 = vmatprep.subr.mxu0 0.0
    %1267 = vmatpush1.msra.mxu0 0.0
    %1268 = vmatprep.subr.mxu0 0.0
    %1269 = vmatpush1.msra.mxu0 0.0
    %1270 = vmatprep.subr.mxu0 0.0
    %1271 = vmatpush1.msra.mxu0 0.0
    %1272 = vmatprep.subr.mxu0 0.0
    %1273 = vmatpush1.msra.mxu0 0.0
    %1274 = vmatprep.subr.mxu0 0.0
    %1275 = vmatpush1.msra.mxu0 0.0
    %1276 = vmatprep.subr.mxu0 0.0
    %1277 = vmatpush1.msra.mxu0 0.0
    %1278 = vmatprep.subr.mxu0 0.0
    %1279 = vmatpush1.msra.mxu0 0.0
    %1280 = vmatprep.mubr.f32.mxu0 0.0
    %1281 = vmatmul.mubr.f32.gmra.mrb[0].mxu0 %v1214
    %v1282 = vpop.f32.mrb[0].mxu0
    %v1283 = vadd.f32 %v1208, %v1282
    %v1284 = vpop.f32.mrb[0].mxu0
    %1285 = vdwg.mxu0
    %v1286 = vxor.u32 %v1283, 2147483648
    %v1287 = vmul.f32 %v1286, 1.442695
    %v1288 = vpow.pop %v1287
    %v1289 = vadd.f32 %v1288, 1.0
    %v1290 = vrcp.pop %v1289
    %v1291 = vmul.f32 1.0, %v1290
    %v1292 = vtanh.pop %v1283
    %v1293 = vmul.f32 %v1291, %v1157
    %1295 = vrot.lane.b32.xlu0 %v1292, 64
    %v1296 = vpop.permute.xlu0 %1295
    %v1298 = vmul.f32 %v1291, %v1296
    %1300 = vrot.lane.b32.xlu0 %v1298, 32
    %v1301 = vpop.permute.xlu0 %1300
    %v1303 = vadd.f32 %v1293, %v1301
    %v1304 = vtanh.pop %v1303
    %1306 = vrot.lane.b32.xlu0 %v1304, 64
    %v1307 = vpop.permute.xlu0 %1306
    %v1309 = vmul.f32 %v1291, %v1307
    %s1310 = sadd.s32 %s40, 7
    %v1311 = vstv %s1310
    %vm1312 = vcmp.gt.s32.totalorder %v37, %v1311
    %v1313 = vsel %vm1312, %v1309, %v1156
    %v1314 = vsel %vm1312, %v1303, %v1157
    %1316 = vrot.lane.b32.xlu0 %v1313, 32
    %v1317 = vpop.permute.xlu0 %1316
    %1319 = vst.msk [vmem:[#allocation2] sm:$0xff] %vm63, %v1317
    %1321 = vrot.lane.b32.xlu0 %v1314, 96
    %v1322 = vpop.permute.xlu0 %1321
    %1324 = vst.msk [vmem:[#allocation3] sm:$0xff] %vm63, %v1322
    // Predicated region
    $region22: #{tpu_custom_call.1} parent=1 // pred_check
      %p1325 = pneg %p19
    $region23: #{tpu_custom_call.1} parent=1 // pred_check_branch
      %1327 = sbr.rel (%p1325) target = $region25
    $region24: #{tpu_custom_call.1} parent=1 // pred_region
      %1328 = vst.msk [vmem:[#allocation4] sm:$0xff] %vm63, %v1317
    $region25: #{tpu_custom_call.1} parent=1 // pred_fallthru
      _
    // Predicated region
    $region26: #{tpu_custom_call.1} parent=1 // pred_check
      _
    $region27: #{tpu_custom_call.1} parent=1 // pred_check_branch
      %1330 = sbr.rel (0) target = $region29
    $region28: #{tpu_custom_call.1} parent=1 // pred_region
      %s1332 = ssub.s32 128, 128
      %1333 = vsyncadd [#allocation5], %s1332
      %s1335 = sshll.u32 [#allocation4], 4
      %s1336 = int_to_ptr.vmem [resolvable:$true] %s1335
      %1338 = dma.vmem_to_hbm [thread:$0]  %s1336, 128, %s4, [#allocation5]
    $region29: #{tpu_custom_call.1} parent=1 // pred_fallthru
      _
    // Predicated region
    $region30: #{tpu_custom_call.1} parent=1 // pred_check
      _
    $region31: #{tpu_custom_call.1} parent=1 // pred_check_branch
      %1340 = sbr.rel (0) target = $region33
    $region32: #{tpu_custom_call.1} parent=1 // pred_region
      %1341 = dma.done [#allocation5], 128
    $region33: #{tpu_custom_call.1} parent=1 // pred_fallthru
      _
    %1342 = vsyncpa [#allocation5], 1

</llo_original>
